<compile_context>
chip_gen: v7x
topology: tpu7x:2x2x1
jax: 0.10.0
libtpu: 0.0.40
codegen_flags: <defaults>
</compile_context>

<pallas_src>
from functools import partial

import jax
import jax.numpy as jnp
from jax.experimental import pallas as pl
from jax.experimental.pallas import tpu as pltpu


def _round_up(x, m):
    return ((x + m - 1) // m) * m


def _choose_tile_n(n, cap=512, align=16):
    """Pick an even row tiling.

    n <= cap  -> one tile (rounded up to the sublane alignment, minimal pad).
    n >  cap  -> >= 2 evenly sized tiles (keeps both v7x TCs busy, minimizes
                 padded rows vs. a fixed tile size)."""
    n_al = _round_up(max(n, 1), align)
    if n_al <= cap:
        return n_al
    steps = -(-n_al // cap)                       # ceil division
    return _round_up(-(-n_al // steps), align)


def _default_head_bf16():
    """bf16 VPU epilogue only where the VPU supports bf16 (v6e / v7x)."""
    try:
        kind = jax.devices()[0].device_kind.lower()
    except Exception:
        return False
    return ("v6" in kind) or ("v7" in kind)


def _mlp_kernel(head_bf16, cand_ref, w1c_ref, bias1_ref, w2_ref, b2_ref,
                w3_ref, b3_ref, o_ref):
    # fc: candidates(bf16) @ W1[:512](bf16), f32 accumulation.  The tactic
    # embedding term and b1 are pre-folded into bias1 (1, 512) f32.
    h1 = jnp.dot(cand_ref[...], w1c_ref[...],
                 preferred_element_type=jnp.float32)
    h1 = jnp.maximum(h1 + bias1_ref[...], 0.0)
    # fc2 -> relu.
    h2 = jnp.dot(h1.astype(jnp.bfloat16), w2_ref[...],
                 preferred_element_type=jnp.float32)
    h2 = jnp.maximum(h2 + b2_ref[...], 0.0)
    # head: lane-dense VPU multiply + XLU reduce instead of a (1024, 1) matmul.
    if head_bf16:
        # bf16 multiply (half the VALU vregs on v6e/v7x), f32 accumulation.
        prod = h2.astype(jnp.bfloat16) * w3_ref[...]
        red = jnp.sum(prod, axis=-1, dtype=jnp.float32, keepdims=True)
    else:
        # v5e path: no bf16 VPU, keep the epilogue in f32.
        red = jnp.sum(h2 * w3_ref[...], axis=-1, keepdims=True)
    o_ref[...] = red + b3_ref[0]


def term_policy_forward(candidates, tac, kp, *, tile_cap=512):
    """candidates: (N, 512) f32, tac: scalar int32, kp: prepare_params() dict."""
    n, feat = candidates.shape
    assert feat == 512, "candidates must have 256 * 2 = 512 features"

    tile_n = _choose_tile_n(n, cap=tile_cap)
    n_pad = _round_up(n, tile_n)

    # Stream the candidate rows as bf16 (the MXU sees bf16 anyway): half the
    # HBM bytes and half the per-tile VMEM vs. f32.
    cand = candidates.astype(jnp.bfloat16)
    if n_pad != n:
        cand = jnp.pad(cand, ((0, n_pad - n), (0, 0)))

    # Fused first-layer bias: one row of the precomputed per-tactic table.
    bias1 = kp["bias1_table"][tac][None, :]                  # (1, 512) f32

    grid = (n_pad // tile_n,)
    kernel = partial(_mlp_kernel, kp["head_bf16"])
    out = pl.pallas_call(
        kernel,
        out_shape=jax.ShapeDtypeStruct((n_pad, 1), jnp.float32),
        grid=grid,
        in_specs=[
            pl.BlockSpec((tile_n, 512), lambda i: (i, 0)),       # rows (stream, bf16)
            pl.BlockSpec((512, 512), lambda i: (0, 0)),          # w1_cand bf16 (resident)
            pl.BlockSpec((1, 512), lambda i: (0, 0)),            # fused bias1 f32
            pl.BlockSpec((512, 1024), lambda i: (0, 0)),         # w2 bf16 (resident)
            pl.BlockSpec((1, 1024), lambda i: (0, 0)),           # b2 f32
            pl.BlockSpec((1, 1024), lambda i: (0, 0)),           # w3 row (bf16 or f32)
            pl.BlockSpec(memory_space=pltpu.MemorySpace.SMEM),   # b3 scalar
        ],
        out_specs=pl.BlockSpec((tile_n, 1), lambda i: (i, 0)),
        compiler_params=pltpu.CompilerParams(
            dimension_semantics=("parallel",)),
    )(cand, kp["w1_cand"], bias1, kp["w2"], kp["b2"], kp["w3_row"], kp["b3"])
    return out[:n]


def init_params(key, tactic_size, embedding_dim):
    """Deterministic synthetic parameters (shapes match the nn.Module)."""
    ks = jax.random.split(key, 7)
    in_dim = embedding_dim + 256 * 2

    def lin(kw, kb, fan_in, fan_out):
        bound = 1.0 / jnp.sqrt(fan_in)
        w = jax.random.uniform(kw, (fan_in, fan_out), jnp.float32, -bound, bound)
        b = jax.random.uniform(kb, (1, fan_out), jnp.float32, -bound, bound)
        return w, b

    emb = jax.random.normal(ks[0], (tactic_size, embedding_dim), jnp.float32)
    w1, b1 = lin(ks[1], ks[2], in_dim, 512)
    w2, b2 = lin(ks[3], ks[4], 512, 1024)
    w3, b3 = lin(ks[5], ks[6], 1024, 1)
    return {"emb": emb, "w1": w1, "b1": b1, "w2": w2, "b2": b2,
            "w3": w3, "b3": b3}


def prepare_params(p, *, head_bf16=None):
    """Convert module-layout params into the kernel layout.

    * Splits w1 into the candidate part (bf16, kernel operand) and folds the
      tactic-embedding part + b1 into a per-tactic bias table (T, 512) f32, so
      the forward call only does a row lookup.
    * Weights bf16 for the MXU; w3 row bf16 on v6e/v7x (bf16 VPU) else f32.
    """
    if head_bf16 is None:
        head_bf16 = _default_head_bf16()
    bias1_table = p["emb"] @ p["w1"][512:, :] + p["b1"]       # (T, 512) f32
    w3_row = p["w3"].reshape(1, -1)                           # (1, 1024)
    return {
        "bias1_table": bias1_table,
        "w1_cand": p["w1"][:512, :].astype(jnp.bfloat16),     # (512, 512) bf16
        "w2": p["w2"].astype(jnp.bfloat16),                   # (512, 1024) bf16
        "b2": p["b2"],                                        # (1, 1024) f32
        "w3_row": w3_row.astype(jnp.bfloat16) if head_bf16 else w3_row,
        "b3": p["b3"].reshape(-1),                            # (1,) f32 -> SMEM
        "head_bf16": head_bf16,
    }


def _reference_f32(candidates, tac, p):
    """Full-f32 reference with the original PyTorch-module semantics."""
    n = candidates.shape[0]
    tac_emb = p["emb"][tac].reshape(1, -1)
    x = jnp.concatenate(
        [candidates, jnp.broadcast_to(tac_emb, (n, tac_emb.shape[1]))], axis=1)
    x = jnp.maximum(x @ p["w1"] + p["b1"], 0.0)
    x = jnp.maximum(x @ p["w2"] + p["b2"], 0.0)
    return x @ p["w3"] + p["b3"]


def _reference_bf16(candidates, tac, p, head_bf16):
    """Mirror of the kernel's precision: bf16 MXU operands, f32 accumulation,
    f32 bias/ReLU epilogues, and the same head path as the kernel."""
    tac_emb = p["emb"][tac].reshape(1, -1)
    bias1 = tac_emb @ p["w1"][512:, :] + p["b1"]
    cb = candidates.astype(jnp.bfloat16)
    h1 = jnp.maximum(
        jnp.dot(cb, p["w1"][:512, :].astype(jnp.bfloat16),
                preferred_element_type=jnp.float32) + bias1, 0.0)
    h2 = jnp.maximum(
        jnp.dot(h1.astype(jnp.bfloat16), p["w2"].astype(jnp.bfloat16),
                preferred_element_type=jnp.float32) + p["b2"], 0.0)
    w3_row = p["w3"].reshape(1, -1)
    if head_bf16:
        prod = h2.astype(jnp.bfloat16) * w3_row.astype(jnp.bfloat16)
        head = jnp.sum(prod, axis=-1, dtype=jnp.float32, keepdims=True)
    else:
        head = jnp.sum(h2 * w3_row, axis=-1, keepdims=True)
    return head + p["b3"].reshape(-1)[0]


if __name__ == "__main__":
    TACTIC_SIZE = 16
    EMBEDDING_DIM = 32
    N_CANDIDATES = 8

    key = jax.random.PRNGKey(0)
    k_param, k_cand, k_tac = jax.random.split(key, 3)

    params = init_params(k_param, TACTIC_SIZE, EMBEDDING_DIM)
    candidates = jax.random.normal(k_cand, (N_CANDIDATES, 256 * 2), jnp.float32)
    tac = jax.random.randint(k_tac, (), 0, TACTIC_SIZE, jnp.int32)

    kparams = prepare_params(params)
    out = term_policy_forward(candidates, tac, kparams)
    out = jax.block_until_ready(out)
    assert out.shape == (N_CANDIDATES, 1)

    # Tight check vs a reference using the same bf16 matmul / head precision.
    ref_bf16 = _reference_bf16(candidates, tac, params, kparams["head_bf16"])
    assert jnp.allclose(out, ref_bf16, atol=2e-3, rtol=2e-3), \
        float(jnp.max(jnp.abs(out - ref_bf16)))
    # Loose sanity check vs the full-f32 PyTorch-semantics reference.
    ref_f32 = _reference_f32(candidates, tac, params)
    assert jnp.allclose(out, ref_f32, atol=5e-2, rtol=5e-2), \
        float(jnp.max(jnp.abs(out - ref_f32)))

    print("KERNEL_OK")
</pallas_src>

<mosaic_0001>
module attributes {stable_mosaic.version = 11 : i64} {
  func.func @_mlp_kernel(%arg0: i32, %arg1: memref<16x512xbf16, #tpu.memory_space<vmem>>, %arg2: memref<512x512xbf16, #tpu.memory_space<vmem>>, %arg3: memref<1x512xf32, #tpu.memory_space<vmem>>, %arg4: memref<512x1024xbf16, #tpu.memory_space<vmem>>, %arg5: memref<1x1024xf32, #tpu.memory_space<vmem>>, %arg6: memref<1x1024xf32, #tpu.memory_space<vmem>>, %arg7: memref<1xf32, #tpu.memory_space<smem>>, %arg8: memref<16x1xf32, #tpu.memory_space<vmem>>) attributes {dimension_semantics = [#tpu.dimension_semantics<parallel>], iteration_bounds = array<i64: 1>, scalar_prefetch = 0 : i64, scratch_operands = 0 : i64, tpu.core_type = #tpu.core_type<tc>, window_params = [{transform_indices = @transform_0, window_bounds = array<i64: 16, 512>}, {pipeline_mode = #tpu.pipeline_mode<synchronous>, transform_indices = @transform_1, window_bounds = array<i64: 512, 512>}, {pipeline_mode = #tpu.pipeline_mode<synchronous>, transform_indices = @transform_2, window_bounds = array<i64: 1, 512>}, {pipeline_mode = #tpu.pipeline_mode<synchronous>, transform_indices = @transform_3, window_bounds = array<i64: 512, 1024>}, {pipeline_mode = #tpu.pipeline_mode<synchronous>, transform_indices = @transform_4, window_bounds = array<i64: 1, 1024>}, {pipeline_mode = #tpu.pipeline_mode<synchronous>, transform_indices = @transform_5, window_bounds = array<i64: 1, 1024>}, {transform_indices = @transform_6, window_bounds = array<i64: 1>}, {transform_indices = @transform_7, window_bounds = array<i64: 16, 1>}]} {
    %c0 = arith.constant 0 : index
    %c0_0 = arith.constant 0 : index
    %0 = vector.load %arg1[%c0, %c0_0] : memref<16x512xbf16, #tpu.memory_space<vmem>>, vector<16x512xbf16>
    %c0_1 = arith.constant 0 : index
    %c0_2 = arith.constant 0 : index
    %1 = vector.load %arg2[%c0_1, %c0_2] : memref<512x512xbf16, #tpu.memory_space<vmem>>, vector<512x512xbf16>
    %cst = arith.constant dense<0.000000e+00> : vector<16x512xf32>
    %2 = tpu.matmul %0, %1, %cst {dimension_numbers = #tpu.dot_dimension_numbers<[1], [0], [0], [1], [0, 0, 1, 1], [], []>} : vector<16x512xbf16>, vector<512x512xbf16>, vector<16x512xf32> -> vector<16x512xf32>
    %c0_3 = arith.constant 0 : index
    %c0_4 = arith.constant 0 : index
    %3 = vector.load %arg3[%c0_3, %c0_4] : memref<1x512xf32, #tpu.memory_space<vmem>>, vector<1x512xf32>
    %4 = vector.broadcast %3 : vector<1x512xf32> to vector<16x512xf32>
    %5 = arith.addf %2, %4 : vector<16x512xf32>
    %cst_5 = arith.constant 0.000000e+00 : f32
    %6 = vector.broadcast %cst_5 : f32 to vector<16x512xf32>
    %7 = arith.maximumf %5, %6 : vector<16x512xf32>
    %8 = arith.truncf %7 : vector<16x512xf32> to vector<16x512xbf16>
    %c0_6 = arith.constant 0 : index
    %c0_7 = arith.constant 0 : index
    %9 = vector.load %arg4[%c0_6, %c0_7] : memref<512x1024xbf16, #tpu.memory_space<vmem>>, vector<512x1024xbf16>
    %cst_8 = arith.constant dense<0.000000e+00> : vector<16x1024xf32>
    %10 = tpu.matmul %8, %9, %cst_8 {dimension_numbers = #tpu.dot_dimension_numbers<[1], [0], [0], [1], [0, 0, 1, 1], [], []>} : vector<16x512xbf16>, vector<512x1024xbf16>, vector<16x1024xf32> -> vector<16x1024xf32>
    %c0_9 = arith.constant 0 : index
    %c0_10 = arith.constant 0 : index
    %11 = vector.load %arg5[%c0_9, %c0_10] : memref<1x1024xf32, #tpu.memory_space<vmem>>, vector<1x1024xf32>
    %12 = vector.broadcast %11 : vector<1x1024xf32> to vector<16x1024xf32>
    %13 = arith.addf %10, %12 : vector<16x1024xf32>
    %cst_11 = arith.constant 0.000000e+00 : f32
    %14 = vector.broadcast %cst_11 : f32 to vector<16x1024xf32>
    %15 = arith.maximumf %13, %14 : vector<16x1024xf32>
    %c0_12 = arith.constant 0 : index
    %c0_13 = arith.constant 0 : index
    %16 = vector.load %arg6[%c0_12, %c0_13] : memref<1x1024xf32, #tpu.memory_space<vmem>>, vector<1x1024xf32>
    %17 = vector.broadcast %16 : vector<1x1024xf32> to vector<16x1024xf32>
    %18 = arith.mulf %15, %17 : vector<16x1024xf32>
    %cst_14 = arith.constant dense<0.000000e+00> : vector<16xf32>
    %19 = vector.multi_reduction <add>, %18, %cst_14 [1] : vector<16x1024xf32> to vector<16xf32>
    %20 = vector.shape_cast %19 : vector<16xf32> to vector<16x1xf32>
    %c0_15 = arith.constant 0 : index
    %21 = memref.load %arg7[%c0_15] : memref<1xf32, #tpu.memory_space<smem>>
    %22 = vector.broadcast %21 : f32 to vector<16x1xf32>
    %23 = arith.addf %20, %22 : vector<16x1xf32>
    %c0_16 = arith.constant 0 : index
    %c0_17 = arith.constant 0 : index
    %24 = vector.load %arg8[%c0_16, %c0_17] : memref<16x1xf32, #tpu.memory_space<vmem>>, vector<16x1xf32>
    tpu.vector_store %arg8[%c0_16, %c0_17], %23 {strides = array<i32>} : memref<16x1xf32, #tpu.memory_space<vmem>>, vector<16x1xf32>,
    return
  }
  func.func @transform_0(%arg0: i32) -> (i32, i32) {
    %c0_i32 = arith.constant 0 : i32
    %c0_i32_0 = arith.constant 0 : i32
    return %arg0, %c0_i32 : i32, i32
  }
  func.func @transform_1(%arg0: i32) -> (i32, i32) {
    %c0_i32 = arith.constant 0 : i32
    %c0_i32_0 = arith.constant 0 : i32
    %c0_i32_1 = arith.constant 0 : i32
    return %c0_i32, %c0_i32_0 : i32, i32
  }
  func.func @transform_2(%arg0: i32) -> (i32, i32) {
    %c0_i32 = arith.constant 0 : i32
    %c0_i32_0 = arith.constant 0 : i32
    %c0_i32_1 = arith.constant 0 : i32
    return %c0_i32, %c0_i32_0 : i32, i32
  }
  func.func @transform_3(%arg0: i32) -> (i32, i32) {
    %c0_i32 = arith.constant 0 : i32
    %c0_i32_0 = arith.constant 0 : i32
    %c0_i32_1 = arith.constant 0 : i32
    return %c0_i32, %c0_i32_0 : i32, i32
  }
  func.func @transform_4(%arg0: i32) -> (i32, i32) {
    %c0_i32 = arith.constant 0 : i32
    %c0_i32_0 = arith.constant 0 : i32
    %c0_i32_1 = arith.constant 0 : i32
    return %c0_i32, %c0_i32_0 : i32, i32
  }
  func.func @transform_5(%arg0: i32) -> (i32, i32) {
    %c0_i32 = arith.constant 0 : i32
    %c0_i32_0 = arith.constant 0 : i32
    %c0_i32_1 = arith.constant 0 : i32
    return %c0_i32, %c0_i32_0 : i32, i32
  }
  func.func @transform_6(%arg0: i32) -> i32 {
    %c0_i32 = arith.constant 0 : i32
    %c0_i32_0 = arith.constant 0 : i32
    return %c0_i32 : i32
  }
  func.func @transform_7(%arg0: i32) -> (i32, i32) {
    %c0_i32 = arith.constant 0 : i32
    %c0_i32_0 = arith.constant 0 : i32
    return %arg0, %c0_i32 : i32, i32
  }
}

</mosaic_0001>

<llo_original>
// kernel: tpu_custom_call.1
$region0: #{tpu_custom_call.1}
  #allocation0 [shape = 'u32[]', space=smem, size = 0x4, offset = 0x4, fixed_abs, tag = 'smem constant byte address 0x4 - core index']
  #allocation1 [shape = 'u32[144,128]{1,0:T(1,128)}', space=vmem, size = 0x12000, scoped, tag = 'internal scratch']
  #allocation2 [shape = 'f32[1]{0:T(128)S(6)}', space=smem, size = 0x200, scoped, tag = 'scoped memory for tpu_custom_call.1']
  %s0 = inlined_call_operand.hbm [shape: bf16[16,512], index: 0, kind: input, shape index: {}]
  %s1 = inlined_call_operand.hbm [shape: bf16[512,512], index: 1, kind: input, shape index: {}]
  %s2 = inlined_call_operand.hbm [shape: f32[1,512], index: 2, kind: input, shape index: {}]
  %s3 = inlined_call_operand.hbm [shape: bf16[512,1024], index: 3, kind: input, shape index: {}]
  %s4 = inlined_call_operand.vmem [shape: f32[1,1024], index: 4, kind: input, shape index: {}]
  %s5 = inlined_call_operand.vmem [shape: f32[1,1024], index: 5, kind: input, shape index: {}]
  %s6 = inlined_call_operand.<no memory space> [shape: f32[1], index: 6, kind: input, shape index: {}]
  %s7 = inlined_call_operand.vmem [shape: f32[16,1], index: 7, kind: output, shape index: {}]
  %s8 = sld [smem:[#allocation0]]
  $region54: #{tpu_custom_call.1} parent=0
    _
  %s10 = ssub.s32 1, %s8
  %s11 = scalar_select 0, %s10, %s8
  %12 = sst [smem:[#allocation2]] %s6
  $region1: #{tpu_custom_call.1} parent=0
    #allocation3 [shape = 'u8[16384]{0}', space=vmem, size = 0x4000, scoped, tag = 'input window, operand 0, single buffered']
    #allocation4 [shape = 's32[1]{0}', space=sflag, size = 0x4, scoped, tag = 'scoped memory for tpu_custom_call.1']
    #allocation5 [shape = 'u8[524288]{0}', space=vmem, size = 0x80000, scoped, tag = 'input window, operand 1, single buffered']
    #allocation6 [shape = 's32[1]{0}', space=sflag, size = 0x4, scoped, tag = 'scoped memory for tpu_custom_call.1']
    #allocation7 [shape = 'u8[2048]{0}', space=vmem, size = 0x800, scoped, tag = 'input window, operand 2, single buffered']
    #allocation8 [shape = 'u8[1048576]{0}', space=vmem, size = 0x100000, scoped, tag = 'input window, operand 3, single buffered']
    #allocation9 [shape = 's32[1]{0}', space=sflag, size = 0x4, scoped, tag = 'scoped memory for tpu_custom_call.1']
    %13 = vsyncpa [#allocation4], 0
    %14 = vsyncpa [#allocation6], 0
    %15 = vsyncpa [#allocation9], 0
    // Predicated region
    $region2: #{tpu_custom_call.1} parent=1 // pred_check
      _
    $region3: #{tpu_custom_call.1} parent=1 // pred_check_branch
      %17 = sbr.rel (0) target = $region5
    $region4: #{tpu_custom_call.1} parent=1 // pred_region
      %s19 = ssub.s32 512, 512
      %20 = vsyncadd [#allocation4], %s19
      %s21 = sshll.u32 [#allocation3], 4
      %s22 = int_to_ptr.vmem [resolvable:$true] %s21
      %27 = dma.hbm_to_vmem [thread:$0]  %s0, 512, %s22, [#allocation4], 256, 256, 16
    $region5: #{tpu_custom_call.1} parent=1 // pred_fallthru
      _
    // Predicated region
    $region6: #{tpu_custom_call.1} parent=1 // pred_check
      _
    $region7: #{tpu_custom_call.1} parent=1 // pred_check_branch
      %29 = sbr.rel (0) target = $region9
    $region8: #{tpu_custom_call.1} parent=1 // pred_region
      %s31 = ssub.s32 16384, 16384
      %32 = vsyncadd [#allocation6], %s31
      %s33 = sshll.u32 [#allocation5], 4
      %s34 = int_to_ptr.vmem [resolvable:$true] %s33
      %39 = dma.hbm_to_vmem [thread:$0]  %s1, 16384, %s34, [#allocation6], 256, 256, 16
    $region9: #{tpu_custom_call.1} parent=1 // pred_fallthru
      _
    // Predicated region
    $region10: #{tpu_custom_call.1} parent=1 // pred_check
      _
    $region11: #{tpu_custom_call.1} parent=1 // pred_check_branch
      %41 = sbr.rel (0) target = $region13
    $region12: #{tpu_custom_call.1} parent=1 // pred_region
      %s43 = ssub.s32 64, 64
      %44 = vsyncadd [#allocation6], %s43
      %s46 = sshll.u32 [#allocation7], 4
      %s47 = int_to_ptr.vmem [resolvable:$true] %s46
      %49 = dma.hbm_to_vmem [thread:$0]  %s2, 64, %s47, [#allocation6]
    $region13: #{tpu_custom_call.1} parent=1 // pred_fallthru
      _
    // Predicated region
    $region14: #{tpu_custom_call.1} parent=1 // pred_check
      _
    $region15: #{tpu_custom_call.1} parent=1 // pred_check_branch
      %51 = sbr.rel (0) target = $region17
    $region16: #{tpu_custom_call.1} parent=1 // pred_region
      %s53 = ssub.s32 32768, 32768
      %54 = vsyncadd [#allocation9], %s53
      %s55 = sshll.u32 [#allocation8], 4
      %s56 = int_to_ptr.vmem [resolvable:$true] %s55
      %61 = dma.hbm_to_vmem [thread:$0]  %s3, 32768, %s56, [#allocation9], 512, 512, 32
    $region17: #{tpu_custom_call.1} parent=1 // pred_fallthru
      _
    // Predicated region
    $region18: #{tpu_custom_call.1} parent=1 // pred_check
      _
    $region19: #{tpu_custom_call.1} parent=1 // pred_check_branch
      %63 = sbr.rel (0) target = $region21
    $region20: #{tpu_custom_call.1} parent=1 // pred_region
      _
    $region21: #{tpu_custom_call.1} parent=1 // pred_fallthru
      _
    // Predicated region
    $region22: #{tpu_custom_call.1} parent=1 // pred_check
      _
    $region23: #{tpu_custom_call.1} parent=1 // pred_check_branch
      %65 = sbr.rel (0) target = $region25
    $region24: #{tpu_custom_call.1} parent=1 // pred_region
      _
    $region25: #{tpu_custom_call.1} parent=1 // pred_fallthru
      _
    // Predicated region
    $region26: #{tpu_custom_call.1} parent=1 // pred_check
      _
    $region27: #{tpu_custom_call.1} parent=1 // pred_check_branch
      %67 = sbr.rel (0) target = $region29
    $region28: #{tpu_custom_call.1} parent=1 // pred_region
      _
    $region29: #{tpu_custom_call.1} parent=1 // pred_fallthru
      _
    // Predicated region
    $region30: #{tpu_custom_call.1} parent=1 // pred_check
      _
    $region31: #{tpu_custom_call.1} parent=1 // pred_check_branch
      %69 = sbr.rel (0) target = $region33
    $region32: #{tpu_custom_call.1} parent=1 // pred_region
      %70 = dma.done [#allocation4], 512
    $region33: #{tpu_custom_call.1} parent=1 // pred_fallthru
      _
    // Predicated region
    $region34: #{tpu_custom_call.1} parent=1 // pred_check
      _
    $region35: #{tpu_custom_call.1} parent=1 // pred_check_branch
      %72 = sbr.rel (0) target = $region37
    $region36: #{tpu_custom_call.1} parent=1 // pred_region
      %73 = dma.done [#allocation6], 16384
    $region37: #{tpu_custom_call.1} parent=1 // pred_fallthru
      _
    // Predicated region
    $region38: #{tpu_custom_call.1} parent=1 // pred_check
      _
    $region39: #{tpu_custom_call.1} parent=1 // pred_check_branch
      %75 = sbr.rel (0) target = $region41
    $region40: #{tpu_custom_call.1} parent=1 // pred_region
      %76 = dma.done [#allocation6], 64
    $region41: #{tpu_custom_call.1} parent=1 // pred_fallthru
      _
    // Predicated region
    $region42: #{tpu_custom_call.1} parent=1 // pred_check
      _
    $region43: #{tpu_custom_call.1} parent=1 // pred_check_branch
      %78 = sbr.rel (0) target = $region45
    $region44: #{tpu_custom_call.1} parent=1 // pred_region
      %79 = dma.done [#allocation9], 32768
    $region45: #{tpu_custom_call.1} parent=1 // pred_fallthru
      _
    %v80 = vld [vmem:[#allocation3] sm:$0xff]
    %v81 = vld [vmem:[#allocation3 + $0x8] sm:$0xff]
    %v82 = vld [vmem:[#allocation3 + $0x10] sm:$0xff]
    %v83 = vld [vmem:[#allocation3 + $0x18] sm:$0xff]
    %v84 = vld [vmem:[#allocation5] sm:$0xff]
    %v85 = vld [vmem:[#allocation5 + $0x8] sm:$0xff]
    %v86 = vld [vmem:[#allocation5 + $0x10] sm:$0xff]
    %v87 = vld [vmem:[#allocation5 + $0x18] sm:$0xff]
    %v88 = vld [vmem:[#allocation5 + $0x20] sm:$0xff]
    %v89 = vld [vmem:[#allocation5 + $0x28] sm:$0xff]
    %v90 = vld [vmem:[#allocation5 + $0x30] sm:$0xff]
    %v91 = vld [vmem:[#allocation5 + $0x38] sm:$0xff]
    %v92 = vld [vmem:[#allocation5 + $0x40] sm:$0xff]
    %v93 = vld [vmem:[#allocation5 + $0x48] sm:$0xff]
    %v94 = vld [vmem:[#allocation5 + $0x50] sm:$0xff]
    %v95 = vld [vmem:[#allocation5 + $0x58] sm:$0xff]
    %v96 = vld [vmem:[#allocation5 + $0x60] sm:$0xff]
    %v97 = vld [vmem:[#allocation5 + $0x68] sm:$0xff]
    %v98 = vld [vmem:[#allocation5 + $0x70] sm:$0xff]
    %v99 = vld [vmem:[#allocation5 + $0x78] sm:$0xff]
    %v100 = vld [vmem:[#allocation5 + $0x80] sm:$0xff]
    %v101 = vld [vmem:[#allocation5 + $0x88] sm:$0xff]
    %v102 = vld [vmem:[#allocation5 + $0x90] sm:$0xff]
    %v103 = vld [vmem:[#allocation5 + $0x98] sm:$0xff]
    %v104 = vld [vmem:[#allocation5 + $0xa0] sm:$0xff]
    %v105 = vld [vmem:[#allocation5 + $0xa8] sm:$0xff]
    %v106 = vld [vmem:[#allocation5 + $0xb0] sm:$0xff]
    %v107 = vld [vmem:[#allocation5 + $0xb8] sm:$0xff]
    %v108 = vld [vmem:[#allocation5 + $0xc0] sm:$0xff]
    %v109 = vld [vmem:[#allocation5 + $0xc8] sm:$0xff]
    %v110 = vld [vmem:[#allocation5 + $0xd0] sm:$0xff]
    %v111 = vld [vmem:[#allocation5 + $0xd8] sm:$0xff]
    %v112 = vld [vmem:[#allocation5 + $0xe0] sm:$0xff]
    %v113 = vld [vmem:[#allocation5 + $0xe8] sm:$0xff]
    %v114 = vld [vmem:[#allocation5 + $0xf0] sm:$0xff]
    %v115 = vld [vmem:[#allocation5 + $0xf8] sm:$0xff]
    %v116 = vld [vmem:[#allocation5 + $0x100] sm:$0xff]
    %v117 = vld [vmem:[#allocation5 + $0x108] sm:$0xff]
    %v118 = vld [vmem:[#allocation5 + $0x110] sm:$0xff]
    %v119 = vld [vmem:[#allocation5 + $0x118] sm:$0xff]
    %v120 = vld [vmem:[#allocation5 + $0x120] sm:$0xff]
    %v121 = vld [vmem:[#allocation5 + $0x128] sm:$0xff]
    %v122 = vld [vmem:[#allocation5 + $0x130] sm:$0xff]
    %v123 = vld [vmem:[#allocation5 + $0x138] sm:$0xff]
    %v124 = vld [vmem:[#allocation5 + $0x140] sm:$0xff]
    %v125 = vld [vmem:[#allocation5 + $0x148] sm:$0xff]
    %v126 = vld [vmem:[#allocation5 + $0x150] sm:$0xff]
    %v127 = vld [vmem:[#allocation5 + $0x158] sm:$0xff]
    %v128 = vld [vmem:[#allocation5 + $0x160] sm:$0xff]
    %v129 = vld [vmem:[#allocation5 + $0x168] sm:$0xff]
    %v130 = vld [vmem:[#allocation5 + $0x170] sm:$0xff]
    %v131 = vld [vmem:[#allocation5 + $0x178] sm:$0xff]
    %v132 = vld [vmem:[#allocation5 + $0x180] sm:$0xff]
    %v133 = vld [vmem:[#allocation5 + $0x188] sm:$0xff]
    %v134 = vld [vmem:[#allocation5 + $0x190] sm:$0xff]
    %v135 = vld [vmem:[#allocation5 + $0x198] sm:$0xff]
    %v136 = vld [vmem:[#allocation5 + $0x1a0] sm:$0xff]
    %v137 = vld [vmem:[#allocation5 + $0x1a8] sm:$0xff]
    %v138 = vld [vmem:[#allocation5 + $0x1b0] sm:$0xff]
    %v139 = vld [vmem:[#allocation5 + $0x1b8] sm:$0xff]
    %v140 = vld [vmem:[#allocation5 + $0x1c0] sm:$0xff]
    %v141 = vld [vmem:[#allocation5 + $0x1c8] sm:$0xff]
    %v142 = vld [vmem:[#allocation5 + $0x1d0] sm:$0xff]
    %v143 = vld [vmem:[#allocation5 + $0x1d8] sm:$0xff]
    %v144 = vld [vmem:[#allocation5 + $0x1e0] sm:$0xff]
    %v145 = vld [vmem:[#allocation5 + $0x1e8] sm:$0xff]
    %v146 = vld [vmem:[#allocation5 + $0x1f0] sm:$0xff]
    %v147 = vld [vmem:[#allocation5 + $0x1f8] sm:$0xff]
    %v148 = vld [vmem:[#allocation5 + $0x200] sm:$0xff]
    %v149 = vld [vmem:[#allocation5 + $0x208] sm:$0xff]
    %v150 = vld [vmem:[#allocation5 + $0x210] sm:$0xff]
    %v151 = vld [vmem:[#allocation5 + $0x218] sm:$0xff]
    %v152 = vld [vmem:[#allocation5 + $0x220] sm:$0xff]
    %v153 = vld [vmem:[#allocation5 + $0x228] sm:$0xff]
    %v154 = vld [vmem:[#allocation5 + $0x230] sm:$0xff]
    %v155 = vld [vmem:[#allocation5 + $0x238] sm:$0xff]
    %v156 = vld [vmem:[#allocation5 + $0x240] sm:$0xff]
    %v157 = vld [vmem:[#allocation5 + $0x248] sm:$0xff]
    %v158 = vld [vmem:[#allocation5 + $0x250] sm:$0xff]
    %v159 = vld [vmem:[#allocation5 + $0x258] sm:$0xff]
    %v160 = vld [vmem:[#allocation5 + $0x260] sm:$0xff]
    %v161 = vld [vmem:[#allocation5 + $0x268] sm:$0xff]
    %v162 = vld [vmem:[#allocation5 + $0x270] sm:$0xff]
    %v163 = vld [vmem:[#allocation5 + $0x278] sm:$0xff]
    %v164 = vld [vmem:[#allocation5 + $0x280] sm:$0xff]
    %v165 = vld [vmem:[#allocation5 + $0x288] sm:$0xff]
    %v166 = vld [vmem:[#allocation5 + $0x290] sm:$0xff]
    %v167 = vld [vmem:[#allocation5 + $0x298] sm:$0xff]
    %v168 = vld [vmem:[#allocation5 + $0x2a0] sm:$0xff]
    %v169 = vld [vmem:[#allocation5 + $0x2a8] sm:$0xff]
    %v170 = vld [vmem:[#allocation5 + $0x2b0] sm:$0xff]
    %v171 = vld [vmem:[#allocation5 + $0x2b8] sm:$0xff]
    %v172 = vld [vmem:[#allocation5 + $0x2c0] sm:$0xff]
    %v173 = vld [vmem:[#allocation5 + $0x2c8] sm:$0xff]
    %v174 = vld [vmem:[#allocation5 + $0x2d0] sm:$0xff]
    %v175 = vld [vmem:[#allocation5 + $0x2d8] sm:$0xff]
    %v176 = vld [vmem:[#allocation5 + $0x2e0] sm:$0xff]
    %v177 = vld [vmem:[#allocation5 + $0x2e8] sm:$0xff]
    %v178 = vld [vmem:[#allocation5 + $0x2f0] sm:$0xff]
    %v179 = vld [vmem:[#allocation5 + $0x2f8] sm:$0xff]
    %v180 = vld [vmem:[#allocation5 + $0x300] sm:$0xff]
    %v181 = vld [vmem:[#allocation5 + $0x308] sm:$0xff]
    %v182 = vld [vmem:[#allocation5 + $0x310] sm:$0xff]
    %v183 = vld [vmem:[#allocation5 + $0x318] sm:$0xff]
    %v184 = vld [vmem:[#allocation5 + $0x320] sm:$0xff]
    %v185 = vld [vmem:[#allocation5 + $0x328] sm:$0xff]
    %v186 = vld [vmem:[#allocation5 + $0x330] sm:$0xff]
    %v187 = vld [vmem:[#allocation5 + $0x338] sm:$0xff]
    %v188 = vld [vmem:[#allocation5 + $0x340] sm:$0xff]
    %v189 = vld [vmem:[#allocation5 + $0x348] sm:$0xff]
    %v190 = vld [vmem:[#allocation5 + $0x350] sm:$0xff]
    %v191 = vld [vmem:[#allocation5 + $0x358] sm:$0xff]
    %v192 = vld [vmem:[#allocation5 + $0x360] sm:$0xff]
    %v193 = vld [vmem:[#allocation5 + $0x368] sm:$0xff]
    %v194 = vld [vmem:[#allocation5 + $0x370] sm:$0xff]
    %v195 = vld [vmem:[#allocation5 + $0x378] sm:$0xff]
    %v196 = vld [vmem:[#allocation5 + $0x380] sm:$0xff]
    %v197 = vld [vmem:[#allocation5 + $0x388] sm:$0xff]
    %v198 = vld [vmem:[#allocation5 + $0x390] sm:$0xff]
    %v199 = vld [vmem:[#allocation5 + $0x398] sm:$0xff]
    %v200 = vld [vmem:[#allocation5 + $0x3a0] sm:$0xff]
    %v201 = vld [vmem:[#allocation5 + $0x3a8] sm:$0xff]
    %v202 = vld [vmem:[#allocation5 + $0x3b0] sm:$0xff]
    %v203 = vld [vmem:[#allocation5 + $0x3b8] sm:$0xff]
    %v204 = vld [vmem:[#allocation5 + $0x3c0] sm:$0xff]
    %v205 = vld [vmem:[#allocation5 + $0x3c8] sm:$0xff]
    %v206 = vld [vmem:[#allocation5 + $0x3d0] sm:$0xff]
    %v207 = vld [vmem:[#allocation5 + $0x3d8] sm:$0xff]
    %v208 = vld [vmem:[#allocation5 + $0x3e0] sm:$0xff]
    %v209 = vld [vmem:[#allocation5 + $0x3e8] sm:$0xff]
    %v210 = vld [vmem:[#allocation5 + $0x3f0] sm:$0xff]
    %v211 = vld [vmem:[#allocation5 + $0x3f8] sm:$0xff]
    %v212 = vld [vmem:[#allocation7] sm:$0xf]
    %v214 = vlaneseq
    %v215 = vshrl.u32 %v214, 7
    %v216 = vsub.s32 0, %v215
    %v217 = vrot.slane %v212, %v216
    %v218 = vlaneseq
    %v219 = vshrl.u32 %v218, 7
    %v220 = vsub.s32 1, %v219
    %v221 = vrot.slane %v212, %v220
    %v222 = vlaneseq
    %v223 = vshrl.u32 %v222, 7
    %v224 = vsub.s32 2, %v223
    %v225 = vrot.slane %v212, %v224
    %v226 = vlaneseq
    %v227 = vshrl.u32 %v226, 7
    %v228 = vsub.s32 3, %v227
    %v229 = vrot.slane %v212, %v228
    %v238 = vunpack.c.l.b16 %v80
    %v239 = vunpack.c.h.b16 %v80
    %v240 = vunpack.c.l.b16 %v81
    %v241 = vunpack.c.h.b16 %v81
    %v242 = vunpack.c.l.b16 %v82
    %v243 = vunpack.c.h.b16 %v82
    %v244 = vunpack.c.l.b16 %v83
    %v245 = vunpack.c.h.b16 %v83
    %v246 = vpack.c.b16 %v242, %v238
    %v247 = vpack.c.b16 %v243, %v239
    %v248 = vpack.c.b16 %v244, %v240
    %v249 = vpack.c.b16 %v245, %v241
    %v382 = vunpack.c.l.b16 %v84
    %v383 = vunpack.c.h.b16 %v84
    %v384 = vunpack.c.l.b16 %v85
    %v385 = vunpack.c.h.b16 %v85
    %v386 = vunpack.c.l.b16 %v86
    %v387 = vunpack.c.h.b16 %v86
    %v388 = vunpack.c.l.b16 %v87
    %v389 = vunpack.c.h.b16 %v87
    %v390 = vunpack.c.l.b16 %v88
    %v391 = vunpack.c.h.b16 %v88
    %v392 = vunpack.c.l.b16 %v89
    %v393 = vunpack.c.h.b16 %v89
    %v394 = vunpack.c.l.b16 %v90
    %v395 = vunpack.c.h.b16 %v90
    %v396 = vunpack.c.l.b16 %v91
    %v397 = vunpack.c.h.b16 %v91
    %v398 = vunpack.c.l.b16 %v92
    %v399 = vunpack.c.h.b16 %v92
    %v400 = vunpack.c.l.b16 %v93
    %v401 = vunpack.c.h.b16 %v93
    %v402 = vunpack.c.l.b16 %v94
    %v403 = vunpack.c.h.b16 %v94
    %v404 = vunpack.c.l.b16 %v95
    %v405 = vunpack.c.h.b16 %v95
    %v406 = vunpack.c.l.b16 %v96
    %v407 = vunpack.c.h.b16 %v96
    %v408 = vunpack.c.l.b16 %v97
    %v409 = vunpack.c.h.b16 %v97
    %v410 = vunpack.c.l.b16 %v98
    %v411 = vunpack.c.h.b16 %v98
    %v412 = vunpack.c.l.b16 %v99
    %v413 = vunpack.c.h.b16 %v99
    %v414 = vunpack.c.l.b16 %v100
    %v415 = vunpack.c.h.b16 %v100
    %v416 = vunpack.c.l.b16 %v101
    %v417 = vunpack.c.h.b16 %v101
    %v418 = vunpack.c.l.b16 %v102
    %v419 = vunpack.c.h.b16 %v102
    %v420 = vunpack.c.l.b16 %v103
    %v421 = vunpack.c.h.b16 %v103
    %v422 = vunpack.c.l.b16 %v104
    %v423 = vunpack.c.h.b16 %v104
    %v424 = vunpack.c.l.b16 %v105
    %v425 = vunpack.c.h.b16 %v105
    %v426 = vunpack.c.l.b16 %v106
    %v427 = vunpack.c.h.b16 %v106
    %v428 = vunpack.c.l.b16 %v107
    %v429 = vunpack.c.h.b16 %v107
    %v430 = vunpack.c.l.b16 %v108
    %v431 = vunpack.c.h.b16 %v108
    %v432 = vunpack.c.l.b16 %v109
    %v433 = vunpack.c.h.b16 %v109
    %v434 = vunpack.c.l.b16 %v110
    %v435 = vunpack.c.h.b16 %v110
    %v436 = vunpack.c.l.b16 %v111
    %v437 = vunpack.c.h.b16 %v111
    %v438 = vunpack.c.l.b16 %v112
    %v439 = vunpack.c.h.b16 %v112
    %v440 = vunpack.c.l.b16 %v113
    %v441 = vunpack.c.h.b16 %v113
    %v442 = vunpack.c.l.b16 %v114
    %v443 = vunpack.c.h.b16 %v114
    %v444 = vunpack.c.l.b16 %v115
    %v445 = vunpack.c.h.b16 %v115
    %v446 = vunpack.c.l.b16 %v116
    %v447 = vunpack.c.h.b16 %v116
    %v448 = vunpack.c.l.b16 %v117
    %v449 = vunpack.c.h.b16 %v117
    %v450 = vunpack.c.l.b16 %v118
    %v451 = vunpack.c.h.b16 %v118
    %v452 = vunpack.c.l.b16 %v119
    %v453 = vunpack.c.h.b16 %v119
    %v454 = vunpack.c.l.b16 %v120
    %v455 = vunpack.c.h.b16 %v120
    %v456 = vunpack.c.l.b16 %v121
    %v457 = vunpack.c.h.b16 %v121
    %v458 = vunpack.c.l.b16 %v122
    %v459 = vunpack.c.h.b16 %v122
    %v460 = vunpack.c.l.b16 %v123
    %v461 = vunpack.c.h.b16 %v123
    %v462 = vunpack.c.l.b16 %v124
    %v463 = vunpack.c.h.b16 %v124
    %v464 = vunpack.c.l.b16 %v125
    %v465 = vunpack.c.h.b16 %v125
    %v466 = vunpack.c.l.b16 %v126
    %v467 = vunpack.c.h.b16 %v126
    %v468 = vunpack.c.l.b16 %v127
    %v469 = vunpack.c.h.b16 %v127
    %v470 = vunpack.c.l.b16 %v128
    %v471 = vunpack.c.h.b16 %v128
    %v472 = vunpack.c.l.b16 %v129
    %v473 = vunpack.c.h.b16 %v129
    %v474 = vunpack.c.l.b16 %v130
    %v475 = vunpack.c.h.b16 %v130
    %v476 = vunpack.c.l.b16 %v131
    %v477 = vunpack.c.h.b16 %v131
    %v478 = vunpack.c.l.b16 %v132
    %v479 = vunpack.c.h.b16 %v132
    %v480 = vunpack.c.l.b16 %v133
    %v481 = vunpack.c.h.b16 %v133
    %v482 = vunpack.c.l.b16 %v134
    %v483 = vunpack.c.h.b16 %v134
    %v484 = vunpack.c.l.b16 %v135
    %v485 = vunpack.c.h.b16 %v135
    %v486 = vunpack.c.l.b16 %v136
    %v487 = vunpack.c.h.b16 %v136
    %v488 = vunpack.c.l.b16 %v137
    %v489 = vunpack.c.h.b16 %v137
    %v490 = vunpack.c.l.b16 %v138
    %v491 = vunpack.c.h.b16 %v138
    %v492 = vunpack.c.l.b16 %v139
    %v493 = vunpack.c.h.b16 %v139
    %v494 = vunpack.c.l.b16 %v140
    %v495 = vunpack.c.h.b16 %v140
    %v496 = vunpack.c.l.b16 %v141
    %v497 = vunpack.c.h.b16 %v141
    %v498 = vunpack.c.l.b16 %v142
    %v499 = vunpack.c.h.b16 %v142
    %v500 = vunpack.c.l.b16 %v143
    %v501 = vunpack.c.h.b16 %v143
    %v502 = vunpack.c.l.b16 %v144
    %v503 = vunpack.c.h.b16 %v144
    %v504 = vunpack.c.l.b16 %v145
    %v505 = vunpack.c.h.b16 %v145
    %v506 = vunpack.c.l.b16 %v146
    %v507 = vunpack.c.h.b16 %v146
    %v508 = vunpack.c.l.b16 %v147
    %v509 = vunpack.c.h.b16 %v147
    %v510 = vunpack.c.l.b16 %v148
    %v511 = vunpack.c.h.b16 %v148
    %v512 = vunpack.c.l.b16 %v149
    %v513 = vunpack.c.h.b16 %v149
    %v514 = vunpack.c.l.b16 %v150
    %v515 = vunpack.c.h.b16 %v150
    %v516 = vunpack.c.l.b16 %v151
    %v517 = vunpack.c.h.b16 %v151
    %v518 = vunpack.c.l.b16 %v152
    %v519 = vunpack.c.h.b16 %v152
    %v520 = vunpack.c.l.b16 %v153
    %v521 = vunpack.c.h.b16 %v153
    %v522 = vunpack.c.l.b16 %v154
    %v523 = vunpack.c.h.b16 %v154
    %v524 = vunpack.c.l.b16 %v155
    %v525 = vunpack.c.h.b16 %v155
    %v526 = vunpack.c.l.b16 %v156
    %v527 = vunpack.c.h.b16 %v156
    %v528 = vunpack.c.l.b16 %v157
    %v529 = vunpack.c.h.b16 %v157
    %v530 = vunpack.c.l.b16 %v158
    %v531 = vunpack.c.h.b16 %v158
    %v532 = vunpack.c.l.b16 %v159
    %v533 = vunpack.c.h.b16 %v159
    %v534 = vunpack.c.l.b16 %v160
    %v535 = vunpack.c.h.b16 %v160
    %v536 = vunpack.c.l.b16 %v161
    %v537 = vunpack.c.h.b16 %v161
    %v538 = vunpack.c.l.b16 %v162
    %v539 = vunpack.c.h.b16 %v162
    %v540 = vunpack.c.l.b16 %v163
    %v541 = vunpack.c.h.b16 %v163
    %v542 = vunpack.c.l.b16 %v164
    %v543 = vunpack.c.h.b16 %v164
    %v544 = vunpack.c.l.b16 %v165
    %v545 = vunpack.c.h.b16 %v165
    %v546 = vunpack.c.l.b16 %v166
    %v547 = vunpack.c.h.b16 %v166
    %v548 = vunpack.c.l.b16 %v167
    %v549 = vunpack.c.h.b16 %v167
    %v550 = vunpack.c.l.b16 %v168
    %v551 = vunpack.c.h.b16 %v168
    %v552 = vunpack.c.l.b16 %v169
    %v553 = vunpack.c.h.b16 %v169
    %v554 = vunpack.c.l.b16 %v170
    %v555 = vunpack.c.h.b16 %v170
    %v556 = vunpack.c.l.b16 %v171
    %v557 = vunpack.c.h.b16 %v171
    %v558 = vunpack.c.l.b16 %v172
    %v559 = vunpack.c.h.b16 %v172
    %v560 = vunpack.c.l.b16 %v173
    %v561 = vunpack.c.h.b16 %v173
    %v562 = vunpack.c.l.b16 %v174
    %v563 = vunpack.c.h.b16 %v174
    %v564 = vunpack.c.l.b16 %v175
    %v565 = vunpack.c.h.b16 %v175
    %v566 = vunpack.c.l.b16 %v176
    %v567 = vunpack.c.h.b16 %v176
    %v568 = vunpack.c.l.b16 %v177
    %v569 = vunpack.c.h.b16 %v177
    %v570 = vunpack.c.l.b16 %v178
    %v571 = vunpack.c.h.b16 %v178
    %v572 = vunpack.c.l.b16 %v179
    %v573 = vunpack.c.h.b16 %v179
    %v574 = vunpack.c.l.b16 %v180
    %v575 = vunpack.c.h.b16 %v180
    %v576 = vunpack.c.l.b16 %v181
    %v577 = vunpack.c.h.b16 %v181
    %v578 = vunpack.c.l.b16 %v182
    %v579 = vunpack.c.h.b16 %v182
    %v580 = vunpack.c.l.b16 %v183
    %v581 = vunpack.c.h.b16 %v183
    %v582 = vunpack.c.l.b16 %v184
    %v583 = vunpack.c.h.b16 %v184
    %v584 = vunpack.c.l.b16 %v185
    %v585 = vunpack.c.h.b16 %v185
    %v586 = vunpack.c.l.b16 %v186
    %v587 = vunpack.c.h.b16 %v186
    %v588 = vunpack.c.l.b16 %v187
    %v589 = vunpack.c.h.b16 %v187
    %v590 = vunpack.c.l.b16 %v188
    %v591 = vunpack.c.h.b16 %v188
    %v592 = vunpack.c.l.b16 %v189
    %v593 = vunpack.c.h.b16 %v189
    %v594 = vunpack.c.l.b16 %v190
    %v595 = vunpack.c.h.b16 %v190
    %v596 = vunpack.c.l.b16 %v191
    %v597 = vunpack.c.h.b16 %v191
    %v598 = vunpack.c.l.b16 %v192
    %v599 = vunpack.c.h.b16 %v192
    %v600 = vunpack.c.l.b16 %v193
    %v601 = vunpack.c.h.b16 %v193
    %v602 = vunpack.c.l.b16 %v194
    %v603 = vunpack.c.h.b16 %v194
    %v604 = vunpack.c.l.b16 %v195
    %v605 = vunpack.c.h.b16 %v195
    %v606 = vunpack.c.l.b16 %v196
    %v607 = vunpack.c.h.b16 %v196
    %v608 = vunpack.c.l.b16 %v197
    %v609 = vunpack.c.h.b16 %v197
    %v610 = vunpack.c.l.b16 %v198
    %v611 = vunpack.c.h.b16 %v198
    %v612 = vunpack.c.l.b16 %v199
    %v613 = vunpack.c.h.b16 %v199
    %v614 = vunpack.c.l.b16 %v200
    %v615 = vunpack.c.h.b16 %v200
    %v616 = vunpack.c.l.b16 %v201
    %v617 = vunpack.c.h.b16 %v201
    %v618 = vunpack.c.l.b16 %v202
    %v619 = vunpack.c.h.b16 %v202
    %v620 = vunpack.c.l.b16 %v203
    %v621 = vunpack.c.h.b16 %v203
    %v622 = vunpack.c.l.b16 %v204
    %v623 = vunpack.c.h.b16 %v204
    %v624 = vunpack.c.l.b16 %v205
    %v625 = vunpack.c.h.b16 %v205
    %v626 = vunpack.c.l.b16 %v206
    %v627 = vunpack.c.h.b16 %v206
    %v628 = vunpack.c.l.b16 %v207
    %v629 = vunpack.c.h.b16 %v207
    %v630 = vunpack.c.l.b16 %v208
    %v631 = vunpack.c.h.b16 %v208
    %v632 = vunpack.c.l.b16 %v209
    %v633 = vunpack.c.h.b16 %v209
    %v634 = vunpack.c.l.b16 %v210
    %v635 = vunpack.c.h.b16 %v210
    %v636 = vunpack.c.l.b16 %v211
    %v637 = vunpack.c.h.b16 %v211
    %v638 = vpack.c.b16 %v386, %v382
    %v639 = vpack.c.b16 %v387, %v383
    %v640 = vpack.c.b16 %v388, %v384
    %v641 = vpack.c.b16 %v389, %v385
    %v642 = vpack.c.b16 %v394, %v390
    %v643 = vpack.c.b16 %v395, %v391
    %v644 = vpack.c.b16 %v396, %v392
    %v645 = vpack.c.b16 %v397, %v393
    %v646 = vpack.c.b16 %v402, %v398
    %v647 = vpack.c.b16 %v403, %v399
    %v648 = vpack.c.b16 %v404, %v400
    %v649 = vpack.c.b16 %v405, %v401
    %v650 = vpack.c.b16 %v410, %v406
    %v651 = vpack.c.b16 %v411, %v407
    %v652 = vpack.c.b16 %v412, %v408
    %v653 = vpack.c.b16 %v413, %v409
    %v654 = vpack.c.b16 %v418, %v414
    %v655 = vpack.c.b16 %v419, %v415
    %v656 = vpack.c.b16 %v420, %v416
    %v657 = vpack.c.b16 %v421, %v417
    %v658 = vpack.c.b16 %v426, %v422
    %v659 = vpack.c.b16 %v427, %v423
    %v660 = vpack.c.b16 %v428, %v424
    %v661 = vpack.c.b16 %v429, %v425
    %v662 = vpack.c.b16 %v434, %v430
    %v663 = vpack.c.b16 %v435, %v431
    %v664 = vpack.c.b16 %v436, %v432
    %v665 = vpack.c.b16 %v437, %v433
    %v666 = vpack.c.b16 %v442, %v438
    %v667 = vpack.c.b16 %v443, %v439
    %v668 = vpack.c.b16 %v444, %v440
    %v669 = vpack.c.b16 %v445, %v441
    %v670 = vpack.c.b16 %v450, %v446
    %v671 = vpack.c.b16 %v451, %v447
    %v672 = vpack.c.b16 %v452, %v448
    %v673 = vpack.c.b16 %v453, %v449
    %v674 = vpack.c.b16 %v458, %v454
    %v675 = vpack.c.b16 %v459, %v455
    %v676 = vpack.c.b16 %v460, %v456
    %v677 = vpack.c.b16 %v461, %v457
    %v678 = vpack.c.b16 %v466, %v462
    %v679 = vpack.c.b16 %v467, %v463
    %v680 = vpack.c.b16 %v468, %v464
    %v681 = vpack.c.b16 %v469, %v465
    %v682 = vpack.c.b16 %v474, %v470
    %v683 = vpack.c.b16 %v475, %v471
    %v684 = vpack.c.b16 %v476, %v472
    %v685 = vpack.c.b16 %v477, %v473
    %v686 = vpack.c.b16 %v482, %v478
    %v687 = vpack.c.b16 %v483, %v479
    %v688 = vpack.c.b16 %v484, %v480
    %v689 = vpack.c.b16 %v485, %v481
    %v690 = vpack.c.b16 %v490, %v486
    %v691 = vpack.c.b16 %v491, %v487
    %v692 = vpack.c.b16 %v492, %v488
    %v693 = vpack.c.b16 %v493, %v489
    %v694 = vpack.c.b16 %v498, %v494
    %v695 = vpack.c.b16 %v499, %v495
    %v696 = vpack.c.b16 %v500, %v496
    %v697 = vpack.c.b16 %v501, %v497
    %v698 = vpack.c.b16 %v506, %v502
    %v699 = vpack.c.b16 %v507, %v503
    %v700 = vpack.c.b16 %v508, %v504
    %v701 = vpack.c.b16 %v509, %v505
    %v702 = vpack.c.b16 %v514, %v510
    %v703 = vpack.c.b16 %v515, %v511
    %v704 = vpack.c.b16 %v516, %v512
    %v705 = vpack.c.b16 %v517, %v513
    %v706 = vpack.c.b16 %v522, %v518
    %v707 = vpack.c.b16 %v523, %v519
    %v708 = vpack.c.b16 %v524, %v520
    %v709 = vpack.c.b16 %v525, %v521
    %v710 = vpack.c.b16 %v530, %v526
    %v711 = vpack.c.b16 %v531, %v527
    %v712 = vpack.c.b16 %v532, %v528
    %v713 = vpack.c.b16 %v533, %v529
    %v714 = vpack.c.b16 %v538, %v534
    %v715 = vpack.c.b16 %v539, %v535
    %v716 = vpack.c.b16 %v540, %v536
    %v717 = vpack.c.b16 %v541, %v537
    %v718 = vpack.c.b16 %v546, %v542
    %v719 = vpack.c.b16 %v547, %v543
    %v720 = vpack.c.b16 %v548, %v544
    %v721 = vpack.c.b16 %v549, %v545
    %v722 = vpack.c.b16 %v554, %v550
    %v723 = vpack.c.b16 %v555, %v551
    %v724 = vpack.c.b16 %v556, %v552
    %v725 = vpack.c.b16 %v557, %v553
    %v726 = vpack.c.b16 %v562, %v558
    %v727 = vpack.c.b16 %v563, %v559
    %v728 = vpack.c.b16 %v564, %v560
    %v729 = vpack.c.b16 %v565, %v561
    %v730 = vpack.c.b16 %v570, %v566
    %v731 = vpack.c.b16 %v571, %v567
    %v732 = vpack.c.b16 %v572, %v568
    %v733 = vpack.c.b16 %v573, %v569
    %v734 = vpack.c.b16 %v578, %v574
    %v735 = vpack.c.b16 %v579, %v575
    %v736 = vpack.c.b16 %v580, %v576
    %v737 = vpack.c.b16 %v581, %v577
    %v738 = vpack.c.b16 %v586, %v582
    %v739 = vpack.c.b16 %v587, %v583
    %v740 = vpack.c.b16 %v588, %v584
    %v741 = vpack.c.b16 %v589, %v585
    %v742 = vpack.c.b16 %v594, %v590
    %v743 = vpack.c.b16 %v595, %v591
    %v744 = vpack.c.b16 %v596, %v592
    %v745 = vpack.c.b16 %v597, %v593
    %v746 = vpack.c.b16 %v602, %v598
    %v747 = vpack.c.b16 %v603, %v599
    %v748 = vpack.c.b16 %v604, %v600
    %v749 = vpack.c.b16 %v605, %v601
    %v750 = vpack.c.b16 %v610, %v606
    %v751 = vpack.c.b16 %v611, %v607
    %v752 = vpack.c.b16 %v612, %v608
    %v753 = vpack.c.b16 %v613, %v609
    %v754 = vpack.c.b16 %v618, %v614
    %v755 = vpack.c.b16 %v619, %v615
    %v756 = vpack.c.b16 %v620, %v616
    %v757 = vpack.c.b16 %v621, %v617
    %v758 = vpack.c.b16 %v626, %v622
    %v759 = vpack.c.b16 %v627, %v623
    %v760 = vpack.c.b16 %v628, %v624
    %v761 = vpack.c.b16 %v629, %v625
    %v762 = vpack.c.b16 %v634, %v630
    %v763 = vpack.c.b16 %v635, %v631
    %v764 = vpack.c.b16 %v636, %v632
    %v765 = vpack.c.b16 %v637, %v633
    %894 = vmatprep.subr.bf16.mxu0 %v639
    %895 = vmatpush1.bf16.msra.mxu0 %v638
    %896 = vmatprep.subr.bf16.mxu0 %v643
    %897 = vmatpush1.bf16.msra.mxu0 %v642
    %898 = vmatprep.subr.bf16.mxu0 %v647
    %899 = vmatpush1.bf16.msra.mxu0 %v646
    %900 = vmatprep.subr.bf16.mxu0 %v651
    %901 = vmatpush1.bf16.msra.mxu0 %v650
    %902 = vmatprep.subr.bf16.mxu0 %v655
    %903 = vmatpush1.bf16.msra.mxu0 %v654
    %904 = vmatprep.subr.bf16.mxu0 %v659
    %905 = vmatpush1.bf16.msra.mxu0 %v658
    %906 = vmatprep.subr.bf16.mxu0 %v663
    %907 = vmatpush1.bf16.msra.mxu0 %v662
    %908 = vmatprep.subr.bf16.mxu0 %v667
    %909 = vmatpush1.bf16.msra.mxu0 %v666
    %910 = vmatprep.subr.bf16.mxu0 %v671
    %911 = vmatpush1.bf16.msra.mxu0 %v670
    %912 = vmatprep.subr.bf16.mxu0 %v675
    %913 = vmatpush1.bf16.msra.mxu0 %v674
    %914 = vmatprep.subr.bf16.mxu0 %v679
    %915 = vmatpush1.bf16.msra.mxu0 %v678
    %916 = vmatprep.subr.bf16.mxu0 %v683
    %917 = vmatpush1.bf16.msra.mxu0 %v682
    %918 = vmatprep.subr.bf16.mxu0 %v687
    %919 = vmatpush1.bf16.msra.mxu0 %v686
    %920 = vmatprep.subr.bf16.mxu0 %v691
    %921 = vmatpush1.bf16.msra.mxu0 %v690
    %922 = vmatprep.subr.bf16.mxu0 %v695
    %923 = vmatpush1.bf16.msra.mxu0 %v694
    %924 = vmatprep.subr.bf16.mxu0 %v699
    %925 = vmatpush1.bf16.msra.mxu0 %v698
    %926 = vmatprep.mubr.bf16.mxu0 %v247
    %927 = vmatmul.mubr.bf16.gmra.mrb[0].mxu0 %v246
    %v928 = vpop.f32.mrb[0].mxu0
    %v929 = vadd.f32 %v217, %v928
    %v930 = vpop.f32.mrb[0].mxu0
    %v931 = vadd.f32 %v221, %v930
    %v932 = vpop.f32.mrb[0].mxu0
    %v933 = vadd.f32 %v217, %v932
    %v934 = vpop.f32.mrb[0].mxu0
    %v935 = vadd.f32 %v221, %v934
    %936 = vdwg.mxu0
    %937 = vmatprep.subr.bf16.mxu0 %v703
    %938 = vmatpush1.bf16.msra.mxu0 %v702
    %939 = vmatprep.subr.bf16.mxu0 %v707
    %940 = vmatpush1.bf16.msra.mxu0 %v706
    %941 = vmatprep.subr.bf16.mxu0 %v711
    %942 = vmatpush1.bf16.msra.mxu0 %v710
    %943 = vmatprep.subr.bf16.mxu0 %v715
    %944 = vmatpush1.bf16.msra.mxu0 %v714
    %945 = vmatprep.subr.bf16.mxu0 %v719
    %946 = vmatpush1.bf16.msra.mxu0 %v718
    %947 = vmatprep.subr.bf16.mxu0 %v723
    %948 = vmatpush1.bf16.msra.mxu0 %v722
    %949 = vmatprep.subr.bf16.mxu0 %v727
    %950 = vmatpush1.bf16.msra.mxu0 %v726
    %951 = vmatprep.subr.bf16.mxu0 %v731
    %952 = vmatpush1.bf16.msra.mxu0 %v730
    %953 = vmatprep.subr.bf16.mxu0 %v735
    %954 = vmatpush1.bf16.msra.mxu0 %v734
    %955 = vmatprep.subr.bf16.mxu0 %v739
    %956 = vmatpush1.bf16.msra.mxu0 %v738
    %957 = vmatprep.subr.bf16.mxu0 %v743
    %958 = vmatpush1.bf16.msra.mxu0 %v742
    %959 = vmatprep.subr.bf16.mxu0 %v747
    %960 = vmatpush1.bf16.msra.mxu0 %v746
    %961 = vmatprep.subr.bf16.mxu0 %v751
    %962 = vmatpush1.bf16.msra.mxu0 %v750
    %963 = vmatprep.subr.bf16.mxu0 %v755
    %964 = vmatpush1.bf16.msra.mxu0 %v754
    %965 = vmatprep.subr.bf16.mxu0 %v759
    %966 = vmatpush1.bf16.msra.mxu0 %v758
    %967 = vmatprep.subr.bf16.mxu0 %v763
    %968 = vmatpush1.bf16.msra.mxu0 %v762
    %969 = vmatprep.mubr.bf16.mxu0 %v249
    %970 = vmatmul.mubr.bf16.gmra.mrb[0].mxu0 %v248
    %v971 = vpop.f32.mrb[0].mxu0
    %v972 = vadd.f32 %v929, %v971
    %v973 = vpop.f32.mrb[0].mxu0
    %v974 = vadd.f32 %v931, %v973
    %v975 = vpop.f32.mrb[0].mxu0
    %v976 = vadd.f32 %v933, %v975
    %v977 = vpop.f32.mrb[0].mxu0
    %v978 = vadd.f32 %v935, %v977
    %979 = vdwg.mxu0
    %980 = vmatprep.subr.bf16.mxu0 %v641
    %981 = vmatpush1.bf16.msra.mxu0 %v640
    %982 = vmatprep.subr.bf16.mxu0 %v645
    %983 = vmatpush1.bf16.msra.mxu0 %v644
    %984 = vmatprep.subr.bf16.mxu0 %v649
    %985 = vmatpush1.bf16.msra.mxu0 %v648
    %986 = vmatprep.subr.bf16.mxu0 %v653
    %987 = vmatpush1.bf16.msra.mxu0 %v652
    %988 = vmatprep.subr.bf16.mxu0 %v657
    %989 = vmatpush1.bf16.msra.mxu0 %v656
    %990 = vmatprep.subr.bf16.mxu0 %v661
    %991 = vmatpush1.bf16.msra.mxu0 %v660
    %992 = vmatprep.subr.bf16.mxu0 %v665
    %993 = vmatpush1.bf16.msra.mxu0 %v664
    %994 = vmatprep.subr.bf16.mxu0 %v669
    %995 = vmatpush1.bf16.msra.mxu0 %v668
    %996 = vmatprep.subr.bf16.mxu0 %v673
    %997 = vmatpush1.bf16.msra.mxu0 %v672
    %998 = vmatprep.subr.bf16.mxu0 %v677
    %999 = vmatpush1.bf16.msra.mxu0 %v676
    %1000 = vmatprep.subr.bf16.mxu0 %v681
    %1001 = vmatpush1.bf16.msra.mxu0 %v680
    %1002 = vmatprep.subr.bf16.mxu0 %v685
    %1003 = vmatpush1.bf16.msra.mxu0 %v684
    %1004 = vmatprep.subr.bf16.mxu0 %v689
    %1005 = vmatpush1.bf16.msra.mxu0 %v688
    %1006 = vmatprep.subr.bf16.mxu0 %v693
    %1007 = vmatpush1.bf16.msra.mxu0 %v692
    %1008 = vmatprep.subr.bf16.mxu0 %v697
    %1009 = vmatpush1.bf16.msra.mxu0 %v696
    %1010 = vmatprep.subr.bf16.mxu0 %v701
    %1011 = vmatpush1.bf16.msra.mxu0 %v700
    %1012 = vmatprep.mubr.bf16.mxu0 %v247
    %1013 = vmatmul.mubr.bf16.gmra.mrb[0].mxu0 %v246
    %v1014 = vpop.f32.mrb[0].mxu0
    %v1015 = vadd.f32 %v225, %v1014
    %v1016 = vpop.f32.mrb[0].mxu0
    %v1017 = vadd.f32 %v229, %v1016
    %v1018 = vpop.f32.mrb[0].mxu0
    %v1019 = vadd.f32 %v225, %v1018
    %v1020 = vpop.f32.mrb[0].mxu0
    %v1021 = vadd.f32 %v229, %v1020
    %1022 = vdwg.mxu0
    %1023 = vmatprep.subr.bf16.mxu0 %v705
    %1024 = vmatpush1.bf16.msra.mxu0 %v704
    %1025 = vmatprep.subr.bf16.mxu0 %v709
    %1026 = vmatpush1.bf16.msra.mxu0 %v708
    %1027 = vmatprep.subr.bf16.mxu0 %v713
    %1028 = vmatpush1.bf16.msra.mxu0 %v712
    %1029 = vmatprep.subr.bf16.mxu0 %v717
    %1030 = vmatpush1.bf16.msra.mxu0 %v716
    %1031 = vmatprep.subr.bf16.mxu0 %v721
    %1032 = vmatpush1.bf16.msra.mxu0 %v720
    %1033 = vmatprep.subr.bf16.mxu0 %v725
    %1034 = vmatpush1.bf16.msra.mxu0 %v724
    %1035 = vmatprep.subr.bf16.mxu0 %v729
    %1036 = vmatpush1.bf16.msra.mxu0 %v728
    %1037 = vmatprep.subr.bf16.mxu0 %v733
    %1038 = vmatpush1.bf16.msra.mxu0 %v732
    %1039 = vmatprep.subr.bf16.mxu0 %v737
    %1040 = vmatpush1.bf16.msra.mxu0 %v736
    %1041 = vmatprep.subr.bf16.mxu0 %v741
    %1042 = vmatpush1.bf16.msra.mxu0 %v740
    %1043 = vmatprep.subr.bf16.mxu0 %v745
    %1044 = vmatpush1.bf16.msra.mxu0 %v744
    %1045 = vmatprep.subr.bf16.mxu0 %v749
    %1046 = vmatpush1.bf16.msra.mxu0 %v748
    %1047 = vmatprep.subr.bf16.mxu0 %v753
    %1048 = vmatpush1.bf16.msra.mxu0 %v752
    %1049 = vmatprep.subr.bf16.mxu0 %v757
    %1050 = vmatpush1.bf16.msra.mxu0 %v756
    %1051 = vmatprep.subr.bf16.mxu0 %v761
    %1052 = vmatpush1.bf16.msra.mxu0 %v760
    %1053 = vmatprep.subr.bf16.mxu0 %v765
    %1054 = vmatpush1.bf16.msra.mxu0 %v764
    %1055 = vmatprep.mubr.bf16.mxu0 %v249
    %1056 = vmatmul.mubr.bf16.gmra.mrb[0].mxu0 %v248
    %v1057 = vpop.f32.mrb[0].mxu0
    %v1058 = vadd.f32 %v1015, %v1057
    %v1059 = vpop.f32.mrb[0].mxu0
    %v1060 = vadd.f32 %v1017, %v1059
    %v1061 = vpop.f32.mrb[0].mxu0
    %v1062 = vadd.f32 %v1019, %v1061
    %v1063 = vpop.f32.mrb[0].mxu0
    %v1064 = vadd.f32 %v1021, %v1063
    %1065 = vdwg.mxu0
    %v1066 = vmax.f32 %v972, 0.0
    %v1067 = vmax.f32 %v974, 0.0
    %v1068 = vmax.f32 %v1058, 0.0
    %v1069 = vmax.f32 %v1060, 0.0
    %v1070 = vmax.f32 %v976, 0.0
    %v1071 = vmax.f32 %v978, 0.0
    %v1072 = vmax.f32 %v1062, 0.0
    %v1073 = vmax.f32 %v1064, 0.0
    %v1074 = vpack.c.bf16 %v1070, %v1066
    %v1075 = vpack.c.bf16 %v1071, %v1067
    %v1076 = vpack.c.bf16 %v1072, %v1068
    %v1077 = vpack.c.bf16 %v1073, %v1069
    %v1078 = vld [vmem:[#allocation8] sm:$0xff]
    %v1079 = vld [vmem:[#allocation8 + $0x8] sm:$0xff]
    %v1080 = vld [vmem:[#allocation8 + $0x10] sm:$0xff]
    %v1081 = vld [vmem:[#allocation8 + $0x18] sm:$0xff]
    %v1082 = vld [vmem:[#allocation8 + $0x20] sm:$0xff]
    %v1083 = vld [vmem:[#allocation8 + $0x28] sm:$0xff]
    %v1084 = vld [vmem:[#allocation8 + $0x30] sm:$0xff]
    %v1085 = vld [vmem:[#allocation8 + $0x38] sm:$0xff]
    %v1086 = vld [vmem:[#allocation8 + $0x40] sm:$0xff]
    %v1087 = vld [vmem:[#allocation8 + $0x48] sm:$0xff]
    %v1088 = vld [vmem:[#allocation8 + $0x50] sm:$0xff]
    %v1089 = vld [vmem:[#allocation8 + $0x58] sm:$0xff]
    %v1090 = vld [vmem:[#allocation8 + $0x60] sm:$0xff]
    %v1091 = vld [vmem:[#allocation8 + $0x68] sm:$0xff]
    %v1092 = vld [vmem:[#allocation8 + $0x70] sm:$0xff]
    %v1093 = vld [vmem:[#allocation8 + $0x78] sm:$0xff]
    %v1094 = vld [vmem:[#allocation8 + $0x80] sm:$0xff]
    %v1095 = vld [vmem:[#allocation8 + $0x88] sm:$0xff]
    %v1096 = vld [vmem:[#allocation8 + $0x90] sm:$0xff]
    %v1097 = vld [vmem:[#allocation8 + $0x98] sm:$0xff]
    %v1098 = vld [vmem:[#allocation8 + $0xa0] sm:$0xff]
    %v1099 = vld [vmem:[#allocation8 + $0xa8] sm:$0xff]
    %v1100 = vld [vmem:[#allocation8 + $0xb0] sm:$0xff]
    %v1101 = vld [vmem:[#allocation8 + $0xb8] sm:$0xff]
    %v1102 = vld [vmem:[#allocation8 + $0xc0] sm:$0xff]
    %v1103 = vld [vmem:[#allocation8 + $0xc8] sm:$0xff]
    %v1104 = vld [vmem:[#allocation8 + $0xd0] sm:$0xff]
    %v1105 = vld [vmem:[#allocation8 + $0xd8] sm:$0xff]
    %v1106 = vld [vmem:[#allocation8 + $0xe0] sm:$0xff]
    %v1107 = vld [vmem:[#allocation8 + $0xe8] sm:$0xff]
    %v1108 = vld [vmem:[#allocation8 + $0xf0] sm:$0xff]
    %v1109 = vld [vmem:[#allocation8 + $0xf8] sm:$0xff]
    %v1110 = vld [vmem:[#allocation8 + $0x100] sm:$0xff]
    %v1111 = vld [vmem:[#allocation8 + $0x108] sm:$0xff]
    %v1112 = vld [vmem:[#allocation8 + $0x110] sm:$0xff]
    %v1113 = vld [vmem:[#allocation8 + $0x118] sm:$0xff]
    %v1114 = vld [vmem:[#allocation8 + $0x120] sm:$0xff]
    %v1115 = vld [vmem:[#allocation8 + $0x128] sm:$0xff]
    %v1116 = vld [vmem:[#allocation8 + $0x130] sm:$0xff]
    %v1117 = vld [vmem:[#allocation8 + $0x138] sm:$0xff]
    %v1118 = vld [vmem:[#allocation8 + $0x140] sm:$0xff]
    %v1119 = vld [vmem:[#allocation8 + $0x148] sm:$0xff]
    %v1120 = vld [vmem:[#allocation8 + $0x150] sm:$0xff]
    %v1121 = vld [vmem:[#allocation8 + $0x158] sm:$0xff]
    %v1122 = vld [vmem:[#allocation8 + $0x160] sm:$0xff]
    %v1123 = vld [vmem:[#allocation8 + $0x168] sm:$0xff]
    %v1124 = vld [vmem:[#allocation8 + $0x170] sm:$0xff]
    %v1125 = vld [vmem:[#allocation8 + $0x178] sm:$0xff]
    %v1126 = vld [vmem:[#allocation8 + $0x180] sm:$0xff]
    %v1127 = vld [vmem:[#allocation8 + $0x188] sm:$0xff]
    %v1128 = vld [vmem:[#allocation8 + $0x190] sm:$0xff]
    %v1129 = vld [vmem:[#allocation8 + $0x198] sm:$0xff]
    %v1130 = vld [vmem:[#allocation8 + $0x1a0] sm:$0xff]
    %v1131 = vld [vmem:[#allocation8 + $0x1a8] sm:$0xff]
    %v1132 = vld [vmem:[#allocation8 + $0x1b0] sm:$0xff]
    %v1133 = vld [vmem:[#allocation8 + $0x1b8] sm:$0xff]
    %v1134 = vld [vmem:[#allocation8 + $0x1c0] sm:$0xff]
    %v1135 = vld [vmem:[#allocation8 + $0x1c8] sm:$0xff]
    %v1136 = vld [vmem:[#allocation8 + $0x1d0] sm:$0xff]
    %v1137 = vld [vmem:[#allocation8 + $0x1d8] sm:$0xff]
    %v1138 = vld [vmem:[#allocation8 + $0x1e0] sm:$0xff]
    %v1139 = vld [vmem:[#allocation8 + $0x1e8] sm:$0xff]
    %v1140 = vld [vmem:[#allocation8 + $0x1f0] sm:$0xff]
    %v1141 = vld [vmem:[#allocation8 + $0x1f8] sm:$0xff]
    %v1142 = vld [vmem:[#allocation8 + $0x200] sm:$0xff]
    %v1143 = vld [vmem:[#allocation8 + $0x208] sm:$0xff]
    %v1144 = vld [vmem:[#allocation8 + $0x210] sm:$0xff]
    %v1145 = vld [vmem:[#allocation8 + $0x218] sm:$0xff]
    %v1146 = vld [vmem:[#allocation8 + $0x220] sm:$0xff]
    %v1147 = vld [vmem:[#allocation8 + $0x228] sm:$0xff]
    %v1148 = vld [vmem:[#allocation8 + $0x230] sm:$0xff]
    %v1149 = vld [vmem:[#allocation8 + $0x238] sm:$0xff]
    %v1150 = vld [vmem:[#allocation8 + $0x240] sm:$0xff]
    %v1151 = vld [vmem:[#allocation8 + $0x248] sm:$0xff]
    %v1152 = vld [vmem:[#allocation8 + $0x250] sm:$0xff]
    %v1153 = vld [vmem:[#allocation8 + $0x258] sm:$0xff]
    %v1154 = vld [vmem:[#allocation8 + $0x260] sm:$0xff]
    %v1155 = vld [vmem:[#allocation8 + $0x268] sm:$0xff]
    %v1156 = vld [vmem:[#allocation8 + $0x270] sm:$0xff]
    %v1157 = vld [vmem:[#allocation8 + $0x278] sm:$0xff]
    %v1158 = vld [vmem:[#allocation8 + $0x280] sm:$0xff]
    %v1159 = vld [vmem:[#allocation8 + $0x288] sm:$0xff]
    %v1160 = vld [vmem:[#allocation8 + $0x290] sm:$0xff]
    %v1161 = vld [vmem:[#allocation8 + $0x298] sm:$0xff]
    %v1162 = vld [vmem:[#allocation8 + $0x2a0] sm:$0xff]
    %v1163 = vld [vmem:[#allocation8 + $0x2a8] sm:$0xff]
    %v1164 = vld [vmem:[#allocation8 + $0x2b0] sm:$0xff]
    %v1165 = vld [vmem:[#allocation8 + $0x2b8] sm:$0xff]
    %v1166 = vld [vmem:[#allocation8 + $0x2c0] sm:$0xff]
    %v1167 = vld [vmem:[#allocation8 + $0x2c8] sm:$0xff]
    %v1168 = vld [vmem:[#allocation8 + $0x2d0] sm:$0xff]
    %v1169 = vld [vmem:[#allocation8 + $0x2d8] sm:$0xff]
    %v1170 = vld [vmem:[#allocation8 + $0x2e0] sm:$0xff]
    %v1171 = vld [vmem:[#allocation8 + $0x2e8] sm:$0xff]
    %v1172 = vld [vmem:[#allocation8 + $0x2f0] sm:$0xff]
    %v1173 = vld [vmem:[#allocation8 + $0x2f8] sm:$0xff]
    %v1174 = vld [vmem:[#allocation8 + $0x300] sm:$0xff]
    %v1175 = vld [vmem:[#allocation8 + $0x308] sm:$0xff]
    %v1176 = vld [vmem:[#allocation8 + $0x310] sm:$0xff]
    %v1177 = vld [vmem:[#allocation8 + $0x318] sm:$0xff]
    %v1178 = vld [vmem:[#allocation8 + $0x320] sm:$0xff]
    %v1179 = vld [vmem:[#allocation8 + $0x328] sm:$0xff]
    %v1180 = vld [vmem:[#allocation8 + $0x330] sm:$0xff]
    %v1181 = vld [vmem:[#allocation8 + $0x338] sm:$0xff]
    %v1182 = vld [vmem:[#allocation8 + $0x340] sm:$0xff]
    %v1183 = vld [vmem:[#allocation8 + $0x348] sm:$0xff]
    %v1184 = vld [vmem:[#allocation8 + $0x350] sm:$0xff]
    %v1185 = vld [vmem:[#allocation8 + $0x358] sm:$0xff]
    %v1186 = vld [vmem:[#allocation8 + $0x360] sm:$0xff]
    %v1187 = vld [vmem:[#allocation8 + $0x368] sm:$0xff]
    %v1188 = vld [vmem:[#allocation8 + $0x370] sm:$0xff]
    %v1189 = vld [vmem:[#allocation8 + $0x378] sm:$0xff]
    %v1190 = vld [vmem:[#allocation8 + $0x380] sm:$0xff]
    %v1191 = vld [vmem:[#allocation8 + $0x388] sm:$0xff]
    %v1192 = vld [vmem:[#allocation8 + $0x390] sm:$0xff]
    %v1193 = vld [vmem:[#allocation8 + $0x398] sm:$0xff]
    %v1194 = vld [vmem:[#allocation8 + $0x3a0] sm:$0xff]
    %v1195 = vld [vmem:[#allocation8 + $0x3a8] sm:$0xff]
    %v1196 = vld [vmem:[#allocation8 + $0x3b0] sm:$0xff]
    %v1197 = vld [vmem:[#allocation8 + $0x3b8] sm:$0xff]
    %v1198 = vld [vmem:[#allocation8 + $0x3c0] sm:$0xff]
    %v1199 = vld [vmem:[#allocation8 + $0x3c8] sm:$0xff]
    %v1200 = vld [vmem:[#allocation8 + $0x3d0] sm:$0xff]
    %v1201 = vld [vmem:[#allocation8 + $0x3d8] sm:$0xff]
    %v1202 = vld [vmem:[#allocation8 + $0x3e0] sm:$0xff]
    %v1203 = vld [vmem:[#allocation8 + $0x3e8] sm:$0xff]
    %v1204 = vld [vmem:[#allocation8 + $0x3f0] sm:$0xff]
    %v1205 = vld [vmem:[#allocation8 + $0x3f8] sm:$0xff]
    %v1206 = vld [vmem:[#allocation8 + $0x400] sm:$0xff]
    %v1207 = vld [vmem:[#allocation8 + $0x408] sm:$0xff]
    %v1208 = vld [vmem:[#allocation8 + $0x410] sm:$0xff]
    %v1209 = vld [vmem:[#allocation8 + $0x418] sm:$0xff]
    %v1210 = vld [vmem:[#allocation8 + $0x420] sm:$0xff]
    %v1211 = vld [vmem:[#allocation8 + $0x428] sm:$0xff]
    %v1212 = vld [vmem:[#allocation8 + $0x430] sm:$0xff]
    %v1213 = vld [vmem:[#allocation8 + $0x438] sm:$0xff]
    %v1214 = vld [vmem:[#allocation8 + $0x440] sm:$0xff]
    %v1215 = vld [vmem:[#allocation8 + $0x448] sm:$0xff]
    %v1216 = vld [vmem:[#allocation8 + $0x450] sm:$0xff]
    %v1217 = vld [vmem:[#allocation8 + $0x458] sm:$0xff]
    %v1218 = vld [vmem:[#allocation8 + $0x460] sm:$0xff]
    %v1219 = vld [vmem:[#allocation8 + $0x468] sm:$0xff]
    %v1220 = vld [vmem:[#allocation8 + $0x470] sm:$0xff]
    %v1221 = vld [vmem:[#allocation8 + $0x478] sm:$0xff]
    %v1222 = vld [vmem:[#allocation8 + $0x480] sm:$0xff]
    %v1223 = vld [vmem:[#allocation8 + $0x488] sm:$0xff]
    %v1224 = vld [vmem:[#allocation8 + $0x490] sm:$0xff]
    %v1225 = vld [vmem:[#allocation8 + $0x498] sm:$0xff]
    %v1226 = vld [vmem:[#allocation8 + $0x4a0] sm:$0xff]
    %v1227 = vld [vmem:[#allocation8 + $0x4a8] sm:$0xff]
    %v1228 = vld [vmem:[#allocation8 + $0x4b0] sm:$0xff]
    %v1229 = vld [vmem:[#allocation8 + $0x4b8] sm:$0xff]
    %v1230 = vld [vmem:[#allocation8 + $0x4c0] sm:$0xff]
    %v1231 = vld [vmem:[#allocation8 + $0x4c8] sm:$0xff]
    %v1232 = vld [vmem:[#allocation8 + $0x4d0] sm:$0xff]
    %v1233 = vld [vmem:[#allocation8 + $0x4d8] sm:$0xff]
    %v1234 = vld [vmem:[#allocation8 + $0x4e0] sm:$0xff]
    %v1235 = vld [vmem:[#allocation8 + $0x4e8] sm:$0xff]
    %v1236 = vld [vmem:[#allocation8 + $0x4f0] sm:$0xff]
    %v1237 = vld [vmem:[#allocation8 + $0x4f8] sm:$0xff]
    %v1238 = vld [vmem:[#allocation8 + $0x500] sm:$0xff]
    %v1239 = vld [vmem:[#allocation8 + $0x508] sm:$0xff]
    %v1240 = vld [vmem:[#allocation8 + $0x510] sm:$0xff]
    %v1241 = vld [vmem:[#allocation8 + $0x518] sm:$0xff]
    %v1242 = vld [vmem:[#allocation8 + $0x520] sm:$0xff]
    %v1243 = vld [vmem:[#allocation8 + $0x528] sm:$0xff]
    %v1244 = vld [vmem:[#allocation8 + $0x530] sm:$0xff]
    %v1245 = vld [vmem:[#allocation8 + $0x538] sm:$0xff]
    %v1246 = vld [vmem:[#allocation8 + $0x540] sm:$0xff]
    %v1247 = vld [vmem:[#allocation8 + $0x548] sm:$0xff]
    %v1248 = vld [vmem:[#allocation8 + $0x550] sm:$0xff]
    %v1249 = vld [vmem:[#allocation8 + $0x558] sm:$0xff]
    %v1250 = vld [vmem:[#allocation8 + $0x560] sm:$0xff]
    %v1251 = vld [vmem:[#allocation8 + $0x568] sm:$0xff]
    %v1252 = vld [vmem:[#allocation8 + $0x570] sm:$0xff]
    %v1253 = vld [vmem:[#allocation8 + $0x578] sm:$0xff]
    %v1254 = vld [vmem:[#allocation8 + $0x580] sm:$0xff]
    %v1255 = vld [vmem:[#allocation8 + $0x588] sm:$0xff]
    %v1256 = vld [vmem:[#allocation8 + $0x590] sm:$0xff]
    %v1257 = vld [vmem:[#allocation8 + $0x598] sm:$0xff]
    %v1258 = vld [vmem:[#allocation8 + $0x5a0] sm:$0xff]
    %v1259 = vld [vmem:[#allocation8 + $0x5a8] sm:$0xff]
    %v1260 = vld [vmem:[#allocation8 + $0x5b0] sm:$0xff]
    %v1261 = vld [vmem:[#allocation8 + $0x5b8] sm:$0xff]
    %v1262 = vld [vmem:[#allocation8 + $0x5c0] sm:$0xff]
    %v1263 = vld [vmem:[#allocation8 + $0x5c8] sm:$0xff]
    %v1264 = vld [vmem:[#allocation8 + $0x5d0] sm:$0xff]
    %v1265 = vld [vmem:[#allocation8 + $0x5d8] sm:$0xff]
    %v1266 = vld [vmem:[#allocation8 + $0x5e0] sm:$0xff]
    %v1267 = vld [vmem:[#allocation8 + $0x5e8] sm:$0xff]
    %v1268 = vld [vmem:[#allocation8 + $0x5f0] sm:$0xff]
    %v1269 = vld [vmem:[#allocation8 + $0x5f8] sm:$0xff]
    %v1270 = vld [vmem:[#allocation8 + $0x600] sm:$0xff]
    %v1271 = vld [vmem:[#allocation8 + $0x608] sm:$0xff]
    %v1272 = vld [vmem:[#allocation8 + $0x610] sm:$0xff]
    %v1273 = vld [vmem:[#allocation8 + $0x618] sm:$0xff]
    %v1274 = vld [vmem:[#allocation8 + $0x620] sm:$0xff]
    %v1275 = vld [vmem:[#allocation8 + $0x628] sm:$0xff]
    %v1276 = vld [vmem:[#allocation8 + $0x630] sm:$0xff]
    %v1277 = vld [vmem:[#allocation8 + $0x638] sm:$0xff]
    %v1278 = vld [vmem:[#allocation8 + $0x640] sm:$0xff]
    %v1279 = vld [vmem:[#allocation8 + $0x648] sm:$0xff]
    %v1280 = vld [vmem:[#allocation8 + $0x650] sm:$0xff]
    %v1281 = vld [vmem:[#allocation8 + $0x658] sm:$0xff]
    %v1282 = vld [vmem:[#allocation8 + $0x660] sm:$0xff]
    %v1283 = vld [vmem:[#allocation8 + $0x668] sm:$0xff]
    %v1284 = vld [vmem:[#allocation8 + $0x670] sm:$0xff]
    %v1285 = vld [vmem:[#allocation8 + $0x678] sm:$0xff]
    %v1286 = vld [vmem:[#allocation8 + $0x680] sm:$0xff]
    %v1287 = vld [vmem:[#allocation8 + $0x688] sm:$0xff]
    %v1288 = vld [vmem:[#allocation8 + $0x690] sm:$0xff]
    %v1289 = vld [vmem:[#allocation8 + $0x698] sm:$0xff]
    %v1290 = vld [vmem:[#allocation8 + $0x6a0] sm:$0xff]
    %v1291 = vld [vmem:[#allocation8 + $0x6a8] sm:$0xff]
    %v1292 = vld [vmem:[#allocation8 + $0x6b0] sm:$0xff]
    %v1293 = vld [vmem:[#allocation8 + $0x6b8] sm:$0xff]
    %v1294 = vld [vmem:[#allocation8 + $0x6c0] sm:$0xff]
    %v1295 = vld [vmem:[#allocation8 + $0x6c8] sm:$0xff]
    %v1296 = vld [vmem:[#allocation8 + $0x6d0] sm:$0xff]
    %v1297 = vld [vmem:[#allocation8 + $0x6d8] sm:$0xff]
    %v1298 = vld [vmem:[#allocation8 + $0x6e0] sm:$0xff]
    %v1299 = vld [vmem:[#allocation8 + $0x6e8] sm:$0xff]
    %v1300 = vld [vmem:[#allocation8 + $0x6f0] sm:$0xff]
    %v1301 = vld [vmem:[#allocation8 + $0x6f8] sm:$0xff]
    %v1302 = vld [vmem:[#allocation8 + $0x700] sm:$0xff]
    %v1303 = vld [vmem:[#allocation8 + $0x708] sm:$0xff]
    %v1304 = vld [vmem:[#allocation8 + $0x710] sm:$0xff]
    %v1305 = vld [vmem:[#allocation8 + $0x718] sm:$0xff]
    %v1306 = vld [vmem:[#allocation8 + $0x720] sm:$0xff]
    %v1307 = vld [vmem:[#allocation8 + $0x728] sm:$0xff]
    %v1308 = vld [vmem:[#allocation8 + $0x730] sm:$0xff]
    %v1309 = vld [vmem:[#allocation8 + $0x738] sm:$0xff]
    %v1310 = vld [vmem:[#allocation8 + $0x740] sm:$0xff]
    %v1311 = vld [vmem:[#allocation8 + $0x748] sm:$0xff]
    %v1312 = vld [vmem:[#allocation8 + $0x750] sm:$0xff]
    %v1313 = vld [vmem:[#allocation8 + $0x758] sm:$0xff]
    %v1314 = vld [vmem:[#allocation8 + $0x760] sm:$0xff]
    %v1315 = vld [vmem:[#allocation8 + $0x768] sm:$0xff]
    %v1316 = vld [vmem:[#allocation8 + $0x770] sm:$0xff]
    %v1317 = vld [vmem:[#allocation8 + $0x778] sm:$0xff]
    %v1318 = vld [vmem:[#allocation8 + $0x780] sm:$0xff]
    %v1319 = vld [vmem:[#allocation8 + $0x788] sm:$0xff]
    %v1320 = vld [vmem:[#allocation8 + $0x790] sm:$0xff]
    %v1321 = vld [vmem:[#allocation8 + $0x798] sm:$0xff]
    %v1322 = vld [vmem:[#allocation8 + $0x7a0] sm:$0xff]
    %v1323 = vld [vmem:[#allocation8 + $0x7a8] sm:$0xff]
    %v1324 = vld [vmem:[#allocation8 + $0x7b0] sm:$0xff]
    %v1325 = vld [vmem:[#allocation8 + $0x7b8] sm:$0xff]
    %v1326 = vld [vmem:[#allocation8 + $0x7c0] sm:$0xff]
    %v1327 = vld [vmem:[#allocation8 + $0x7c8] sm:$0xff]
    %v1328 = vld [vmem:[#allocation8 + $0x7d0] sm:$0xff]
    %v1329 = vld [vmem:[#allocation8 + $0x7d8] sm:$0xff]
    %v1330 = vld [vmem:[#allocation8 + $0x7e0] sm:$0xff]
    %v1331 = vld [vmem:[#allocation8 + $0x7e8] sm:$0xff]
    %v1332 = vld [vmem:[#allocation8 + $0x7f0] sm:$0xff]
    %v1333 = vld [vmem:[#allocation8 + $0x7f8] sm:$0xff]
    %v1334 = vld [vmem:[%s4] sm:$0xff]
    %v1336 = vlaneseq
    %v1337 = vshrl.u32 %v1336, 7
    %v1338 = vsub.s32 0, %v1337
    %v1339 = vrot.slane %v1334, %v1338
    %v1340 = vlaneseq
    %v1341 = vshrl.u32 %v1340, 7
    %v1342 = vsub.s32 1, %v1341
    %v1343 = vrot.slane %v1334, %v1342
    %v1344 = vlaneseq
    %v1345 = vshrl.u32 %v1344, 7
    %v1346 = vsub.s32 2, %v1345
    %v1347 = vrot.slane %v1334, %v1346
    %v1348 = vlaneseq
    %v1349 = vshrl.u32 %v1348, 7
    %v1350 = vsub.s32 3, %v1349
    %v1351 = vrot.slane %v1334, %v1350
    %v1352 = vlaneseq
    %v1353 = vshrl.u32 %v1352, 7
    %v1354 = vsub.s32 4, %v1353
    %v1355 = vrot.slane %v1334, %v1354
    %v1356 = vlaneseq
    %v1357 = vshrl.u32 %v1356, 7
    %v1358 = vsub.s32 5, %v1357
    %v1359 = vrot.slane %v1334, %v1358
    %v1360 = vlaneseq
    %v1361 = vshrl.u32 %v1360, 7
    %v1362 = vsub.s32 6, %v1361
    %v1363 = vrot.slane %v1334, %v1362
    %v1364 = vlaneseq
    %v1365 = vshrl.u32 %v1364, 7
    %v1366 = vsub.s32 7, %v1365
    %v1367 = vrot.slane %v1334, %v1366
    %v1632 = vunpack.c.l.b16 %v1078
    %v1633 = vunpack.c.h.b16 %v1078
    %v1634 = vunpack.c.l.b16 %v1079
    %v1635 = vunpack.c.h.b16 %v1079
    %v1636 = vunpack.c.l.b16 %v1080
    %v1637 = vunpack.c.h.b16 %v1080
    %v1638 = vunpack.c.l.b16 %v1081
    %v1639 = vunpack.c.h.b16 %v1081
    %v1640 = vunpack.c.l.b16 %v1082
    %v1641 = vunpack.c.h.b16 %v1082
    %v1642 = vunpack.c.l.b16 %v1083
    %v1643 = vunpack.c.h.b16 %v1083
    %v1644 = vunpack.c.l.b16 %v1084
    %v1645 = vunpack.c.h.b16 %v1084
    %v1646 = vunpack.c.l.b16 %v1085
    %v1647 = vunpack.c.h.b16 %v1085
    %v1648 = vunpack.c.l.b16 %v1086
    %v1649 = vunpack.c.h.b16 %v1086
    %v1650 = vunpack.c.l.b16 %v1087
    %v1651 = vunpack.c.h.b16 %v1087
    %v1652 = vunpack.c.l.b16 %v1088
    %v1653 = vunpack.c.h.b16 %v1088
    %v1654 = vunpack.c.l.b16 %v1089
    %v1655 = vunpack.c.h.b16 %v1089
    %v1656 = vunpack.c.l.b16 %v1090
    %v1657 = vunpack.c.h.b16 %v1090
    %v1658 = vunpack.c.l.b16 %v1091
    %v1659 = vunpack.c.h.b16 %v1091
    %v1660 = vunpack.c.l.b16 %v1092
    %v1661 = vunpack.c.h.b16 %v1092
    %v1662 = vunpack.c.l.b16 %v1093
    %v1663 = vunpack.c.h.b16 %v1093
    %v1664 = vunpack.c.l.b16 %v1094
    %v1665 = vunpack.c.h.b16 %v1094
    %v1666 = vunpack.c.l.b16 %v1095
    %v1667 = vunpack.c.h.b16 %v1095
    %v1668 = vunpack.c.l.b16 %v1096
    %v1669 = vunpack.c.h.b16 %v1096
    %v1670 = vunpack.c.l.b16 %v1097
    %v1671 = vunpack.c.h.b16 %v1097
    %v1672 = vunpack.c.l.b16 %v1098
    %v1673 = vunpack.c.h.b16 %v1098
    %v1674 = vunpack.c.l.b16 %v1099
    %v1675 = vunpack.c.h.b16 %v1099
    %v1676 = vunpack.c.l.b16 %v1100
    %v1677 = vunpack.c.h.b16 %v1100
    %v1678 = vunpack.c.l.b16 %v1101
    %v1679 = vunpack.c.h.b16 %v1101
    %v1680 = vunpack.c.l.b16 %v1102
    %v1681 = vunpack.c.h.b16 %v1102
    %v1682 = vunpack.c.l.b16 %v1103
    %v1683 = vunpack.c.h.b16 %v1103
    %v1684 = vunpack.c.l.b16 %v1104
    %v1685 = vunpack.c.h.b16 %v1104
    %v1686 = vunpack.c.l.b16 %v1105
    %v1687 = vunpack.c.h.b16 %v1105
    %v1688 = vunpack.c.l.b16 %v1106
    %v1689 = vunpack.c.h.b16 %v1106
    %v1690 = vunpack.c.l.b16 %v1107
    %v1691 = vunpack.c.h.b16 %v1107
    %v1692 = vunpack.c.l.b16 %v1108
    %v1693 = vunpack.c.h.b16 %v1108
    %v1694 = vunpack.c.l.b16 %v1109
    %v1695 = vunpack.c.h.b16 %v1109
    %v1696 = vunpack.c.l.b16 %v1110
    %v1697 = vunpack.c.h.b16 %v1110
    %v1698 = vunpack.c.l.b16 %v1111
    %v1699 = vunpack.c.h.b16 %v1111
    %v1700 = vunpack.c.l.b16 %v1112
    %v1701 = vunpack.c.h.b16 %v1112
    %v1702 = vunpack.c.l.b16 %v1113
    %v1703 = vunpack.c.h.b16 %v1113
    %v1704 = vunpack.c.l.b16 %v1114
    %v1705 = vunpack.c.h.b16 %v1114
    %v1706 = vunpack.c.l.b16 %v1115
    %v1707 = vunpack.c.h.b16 %v1115
    %v1708 = vunpack.c.l.b16 %v1116
    %v1709 = vunpack.c.h.b16 %v1116
    %v1710 = vunpack.c.l.b16 %v1117
    %v1711 = vunpack.c.h.b16 %v1117
    %v1712 = vunpack.c.l.b16 %v1118
    %v1713 = vunpack.c.h.b16 %v1118
    %v1714 = vunpack.c.l.b16 %v1119
    %v1715 = vunpack.c.h.b16 %v1119
    %v1716 = vunpack.c.l.b16 %v1120
    %v1717 = vunpack.c.h.b16 %v1120
    %v1718 = vunpack.c.l.b16 %v1121
    %v1719 = vunpack.c.h.b16 %v1121
    %v1720 = vunpack.c.l.b16 %v1122
    %v1721 = vunpack.c.h.b16 %v1122
    %v1722 = vunpack.c.l.b16 %v1123
    %v1723 = vunpack.c.h.b16 %v1123
    %v1724 = vunpack.c.l.b16 %v1124
    %v1725 = vunpack.c.h.b16 %v1124
    %v1726 = vunpack.c.l.b16 %v1125
    %v1727 = vunpack.c.h.b16 %v1125
    %v1728 = vunpack.c.l.b16 %v1126
    %v1729 = vunpack.c.h.b16 %v1126
    %v1730 = vunpack.c.l.b16 %v1127
    %v1731 = vunpack.c.h.b16 %v1127
    %v1732 = vunpack.c.l.b16 %v1128
    %v1733 = vunpack.c.h.b16 %v1128
    %v1734 = vunpack.c.l.b16 %v1129
    %v1735 = vunpack.c.h.b16 %v1129
    %v1736 = vunpack.c.l.b16 %v1130
    %v1737 = vunpack.c.h.b16 %v1130
    %v1738 = vunpack.c.l.b16 %v1131
    %v1739 = vunpack.c.h.b16 %v1131
    %v1740 = vunpack.c.l.b16 %v1132
    %v1741 = vunpack.c.h.b16 %v1132
    %v1742 = vunpack.c.l.b16 %v1133
    %v1743 = vunpack.c.h.b16 %v1133
    %v1744 = vunpack.c.l.b16 %v1134
    %v1745 = vunpack.c.h.b16 %v1134
    %v1746 = vunpack.c.l.b16 %v1135
    %v1747 = vunpack.c.h.b16 %v1135
    %v1748 = vunpack.c.l.b16 %v1136
    %v1749 = vunpack.c.h.b16 %v1136
    %v1750 = vunpack.c.l.b16 %v1137
    %v1751 = vunpack.c.h.b16 %v1137
    %v1752 = vunpack.c.l.b16 %v1138
    %v1753 = vunpack.c.h.b16 %v1138
    %v1754 = vunpack.c.l.b16 %v1139
    %v1755 = vunpack.c.h.b16 %v1139
    %v1756 = vunpack.c.l.b16 %v1140
    %v1757 = vunpack.c.h.b16 %v1140
    %v1758 = vunpack.c.l.b16 %v1141
    %v1759 = vunpack.c.h.b16 %v1141
    %v1760 = vunpack.c.l.b16 %v1142
    %v1761 = vunpack.c.h.b16 %v1142
    %v1762 = vunpack.c.l.b16 %v1143
    %v1763 = vunpack.c.h.b16 %v1143
    %v1764 = vunpack.c.l.b16 %v1144
    %v1765 = vunpack.c.h.b16 %v1144
    %v1766 = vunpack.c.l.b16 %v1145
    %v1767 = vunpack.c.h.b16 %v1145
    %v1768 = vunpack.c.l.b16 %v1146
    %v1769 = vunpack.c.h.b16 %v1146
    %v1770 = vunpack.c.l.b16 %v1147
    %v1771 = vunpack.c.h.b16 %v1147
    %v1772 = vunpack.c.l.b16 %v1148
    %v1773 = vunpack.c.h.b16 %v1148
    %v1774 = vunpack.c.l.b16 %v1149
    %v1775 = vunpack.c.h.b16 %v1149
    %v1776 = vunpack.c.l.b16 %v1150
    %v1777 = vunpack.c.h.b16 %v1150
    %v1778 = vunpack.c.l.b16 %v1151
    %v1779 = vunpack.c.h.b16 %v1151
    %v1780 = vunpack.c.l.b16 %v1152
    %v1781 = vunpack.c.h.b16 %v1152
    %v1782 = vunpack.c.l.b16 %v1153
    %v1783 = vunpack.c.h.b16 %v1153
    %v1784 = vunpack.c.l.b16 %v1154
    %v1785 = vunpack.c.h.b16 %v1154
    %v1786 = vunpack.c.l.b16 %v1155
    %v1787 = vunpack.c.h.b16 %v1155
    %v1788 = vunpack.c.l.b16 %v1156
    %v1789 = vunpack.c.h.b16 %v1156
    %v1790 = vunpack.c.l.b16 %v1157
    %v1791 = vunpack.c.h.b16 %v1157
    %v1792 = vunpack.c.l.b16 %v1158
    %v1793 = vunpack.c.h.b16 %v1158
    %v1794 = vunpack.c.l.b16 %v1159
    %v1795 = vunpack.c.h.b16 %v1159
    %v1796 = vunpack.c.l.b16 %v1160
    %v1797 = vunpack.c.h.b16 %v1160
    %v1798 = vunpack.c.l.b16 %v1161
    %v1799 = vunpack.c.h.b16 %v1161
    %v1800 = vunpack.c.l.b16 %v1162
    %v1801 = vunpack.c.h.b16 %v1162
    %v1802 = vunpack.c.l.b16 %v1163
    %v1803 = vunpack.c.h.b16 %v1163
    %v1804 = vunpack.c.l.b16 %v1164
    %v1805 = vunpack.c.h.b16 %v1164
    %v1806 = vunpack.c.l.b16 %v1165
    %v1807 = vunpack.c.h.b16 %v1165
    %v1808 = vunpack.c.l.b16 %v1166
    %v1809 = vunpack.c.h.b16 %v1166
    %v1810 = vunpack.c.l.b16 %v1167
    %v1811 = vunpack.c.h.b16 %v1167
    %v1812 = vunpack.c.l.b16 %v1168
    %v1813 = vunpack.c.h.b16 %v1168
    %v1814 = vunpack.c.l.b16 %v1169
    %v1815 = vunpack.c.h.b16 %v1169
    %v1816 = vunpack.c.l.b16 %v1170
    %v1817 = vunpack.c.h.b16 %v1170
    %v1818 = vunpack.c.l.b16 %v1171
    %v1819 = vunpack.c.h.b16 %v1171
    %v1820 = vunpack.c.l.b16 %v1172
    %v1821 = vunpack.c.h.b16 %v1172
    %v1822 = vunpack.c.l.b16 %v1173
    %v1823 = vunpack.c.h.b16 %v1173
    %v1824 = vunpack.c.l.b16 %v1174
    %v1825 = vunpack.c.h.b16 %v1174
    %v1826 = vunpack.c.l.b16 %v1175
    %v1827 = vunpack.c.h.b16 %v1175
    %v1828 = vunpack.c.l.b16 %v1176
    %v1829 = vunpack.c.h.b16 %v1176
    %v1830 = vunpack.c.l.b16 %v1177
    %v1831 = vunpack.c.h.b16 %v1177
    %v1832 = vunpack.c.l.b16 %v1178
    %v1833 = vunpack.c.h.b16 %v1178
    %v1834 = vunpack.c.l.b16 %v1179
    %v1835 = vunpack.c.h.b16 %v1179
    %v1836 = vunpack.c.l.b16 %v1180
    %v1837 = vunpack.c.h.b16 %v1180
    %v1838 = vunpack.c.l.b16 %v1181
    %v1839 = vunpack.c.h.b16 %v1181
    %v1840 = vunpack.c.l.b16 %v1182
    %v1841 = vunpack.c.h.b16 %v1182
    %v1842 = vunpack.c.l.b16 %v1183
    %v1843 = vunpack.c.h.b16 %v1183
    %v1844 = vunpack.c.l.b16 %v1184
    %v1845 = vunpack.c.h.b16 %v1184
    %v1846 = vunpack.c.l.b16 %v1185
    %v1847 = vunpack.c.h.b16 %v1185
    %v1848 = vunpack.c.l.b16 %v1186
    %v1849 = vunpack.c.h.b16 %v1186
    %v1850 = vunpack.c.l.b16 %v1187
    %v1851 = vunpack.c.h.b16 %v1187
    %v1852 = vunpack.c.l.b16 %v1188
    %v1853 = vunpack.c.h.b16 %v1188
    %v1854 = vunpack.c.l.b16 %v1189
    %v1855 = vunpack.c.h.b16 %v1189
    %v1856 = vunpack.c.l.b16 %v1190
    %v1857 = vunpack.c.h.b16 %v1190
    %v1858 = vunpack.c.l.b16 %v1191
    %v1859 = vunpack.c.h.b16 %v1191
    %v1860 = vunpack.c.l.b16 %v1192
    %v1861 = vunpack.c.h.b16 %v1192
    %v1862 = vunpack.c.l.b16 %v1193
    %v1863 = vunpack.c.h.b16 %v1193
    %v1864 = vunpack.c.l.b16 %v1194
    %v1865 = vunpack.c.h.b16 %v1194
    %v1866 = vunpack.c.l.b16 %v1195
    %v1867 = vunpack.c.h.b16 %v1195
    %v1868 = vunpack.c.l.b16 %v1196
    %v1869 = vunpack.c.h.b16 %v1196
    %v1870 = vunpack.c.l.b16 %v1197
    %v1871 = vunpack.c.h.b16 %v1197
    %v1872 = vunpack.c.l.b16 %v1198
    %v1873 = vunpack.c.h.b16 %v1198
    %v1874 = vunpack.c.l.b16 %v1199
    %v1875 = vunpack.c.h.b16 %v1199
    %v1876 = vunpack.c.l.b16 %v1200
    %v1877 = vunpack.c.h.b16 %v1200
    %v1878 = vunpack.c.l.b16 %v1201
    %v1879 = vunpack.c.h.b16 %v1201
    %v1880 = vunpack.c.l.b16 %v1202
    %v1881 = vunpack.c.h.b16 %v1202
    %v1882 = vunpack.c.l.b16 %v1203
    %v1883 = vunpack.c.h.b16 %v1203
    %v1884 = vunpack.c.l.b16 %v1204
    %v1885 = vunpack.c.h.b16 %v1204
    %v1886 = vunpack.c.l.b16 %v1205
    %v1887 = vunpack.c.h.b16 %v1205
    %v1888 = vunpack.c.l.b16 %v1206
    %v1889 = vunpack.c.h.b16 %v1206
    %v1890 = vunpack.c.l.b16 %v1207
    %v1891 = vunpack.c.h.b16 %v1207
    %v1892 = vunpack.c.l.b16 %v1208
    %v1893 = vunpack.c.h.b16 %v1208
    %v1894 = vunpack.c.l.b16 %v1209
    %v1895 = vunpack.c.h.b16 %v1209
    %v1896 = vunpack.c.l.b16 %v1210
    %v1897 = vunpack.c.h.b16 %v1210
    %v1898 = vunpack.c.l.b16 %v1211
    %v1899 = vunpack.c.h.b16 %v1211
    %v1900 = vunpack.c.l.b16 %v1212
    %v1901 = vunpack.c.h.b16 %v1212
    %v1902 = vunpack.c.l.b16 %v1213
    %v1903 = vunpack.c.h.b16 %v1213
    %v1904 = vunpack.c.l.b16 %v1214
    %v1905 = vunpack.c.h.b16 %v1214
    %v1906 = vunpack.c.l.b16 %v1215
    %v1907 = vunpack.c.h.b16 %v1215
    %v1908 = vunpack.c.l.b16 %v1216
    %v1909 = vunpack.c.h.b16 %v1216
    %v1910 = vunpack.c.l.b16 %v1217
    %v1911 = vunpack.c.h.b16 %v1217
    %v1912 = vunpack.c.l.b16 %v1218
    %v1913 = vunpack.c.h.b16 %v1218
    %v1914 = vunpack.c.l.b16 %v1219
    %v1915 = vunpack.c.h.b16 %v1219
    %v1916 = vunpack.c.l.b16 %v1220
    %v1917 = vunpack.c.h.b16 %v1220
    %v1918 = vunpack.c.l.b16 %v1221
    %v1919 = vunpack.c.h.b16 %v1221
    %v1920 = vunpack.c.l.b16 %v1222
    %v1921 = vunpack.c.h.b16 %v1222
    %v1922 = vunpack.c.l.b16 %v1223
    %v1923 = vunpack.c.h.b16 %v1223
    %v1924 = vunpack.c.l.b16 %v1224
    %v1925 = vunpack.c.h.b16 %v1224
    %v1926 = vunpack.c.l.b16 %v1225
    %v1927 = vunpack.c.h.b16 %v1225
    %v1928 = vunpack.c.l.b16 %v1226
    %v1929 = vunpack.c.h.b16 %v1226
    %v1930 = vunpack.c.l.b16 %v1227
    %v1931 = vunpack.c.h.b16 %v1227
    %v1932 = vunpack.c.l.b16 %v1228
    %v1933 = vunpack.c.h.b16 %v1228
    %v1934 = vunpack.c.l.b16 %v1229
    %v1935 = vunpack.c.h.b16 %v1229
    %v1936 = vunpack.c.l.b16 %v1230
    %v1937 = vunpack.c.h.b16 %v1230
    %v1938 = vunpack.c.l.b16 %v1231
    %v1939 = vunpack.c.h.b16 %v1231
    %v1940 = vunpack.c.l.b16 %v1232
    %v1941 = vunpack.c.h.b16 %v1232
    %v1942 = vunpack.c.l.b16 %v1233
    %v1943 = vunpack.c.h.b16 %v1233
    %v1944 = vunpack.c.l.b16 %v1234
    %v1945 = vunpack.c.h.b16 %v1234
    %v1946 = vunpack.c.l.b16 %v1235
    %v1947 = vunpack.c.h.b16 %v1235
    %v1948 = vunpack.c.l.b16 %v1236
    %v1949 = vunpack.c.h.b16 %v1236
    %v1950 = vunpack.c.l.b16 %v1237
    %v1951 = vunpack.c.h.b16 %v1237
    %v1952 = vunpack.c.l.b16 %v1238
    %v1953 = vunpack.c.h.b16 %v1238
    %v1954 = vunpack.c.l.b16 %v1239
    %v1955 = vunpack.c.h.b16 %v1239
    %v1956 = vunpack.c.l.b16 %v1240
    %v1957 = vunpack.c.h.b16 %v1240
    %v1958 = vunpack.c.l.b16 %v1241
    %v1959 = vunpack.c.h.b16 %v1241
    %v1960 = vunpack.c.l.b16 %v1242
    %v1961 = vunpack.c.h.b16 %v1242
    %v1962 = vunpack.c.l.b16 %v1243
    %v1963 = vunpack.c.h.b16 %v1243
    %v1964 = vunpack.c.l.b16 %v1244
    %v1965 = vunpack.c.h.b16 %v1244
    %v1966 = vunpack.c.l.b16 %v1245
    %v1967 = vunpack.c.h.b16 %v1245
    %v1968 = vunpack.c.l.b16 %v1246
    %v1969 = vunpack.c.h.b16 %v1246
    %v1970 = vunpack.c.l.b16 %v1247
    %v1971 = vunpack.c.h.b16 %v1247
    %v1972 = vunpack.c.l.b16 %v1248
    %v1973 = vunpack.c.h.b16 %v1248
    %v1974 = vunpack.c.l.b16 %v1249
    %v1975 = vunpack.c.h.b16 %v1249
    %v1976 = vunpack.c.l.b16 %v1250
    %v1977 = vunpack.c.h.b16 %v1250
    %v1978 = vunpack.c.l.b16 %v1251
    %v1979 = vunpack.c.h.b16 %v1251
    %v1980 = vunpack.c.l.b16 %v1252
    %v1981 = vunpack.c.h.b16 %v1252
    %v1982 = vunpack.c.l.b16 %v1253
    %v1983 = vunpack.c.h.b16 %v1253
    %v1984 = vunpack.c.l.b16 %v1254
    %v1985 = vunpack.c.h.b16 %v1254
    %v1986 = vunpack.c.l.b16 %v1255
    %v1987 = vunpack.c.h.b16 %v1255
    %v1988 = vunpack.c.l.b16 %v1256
    %v1989 = vunpack.c.h.b16 %v1256
    %v1990 = vunpack.c.l.b16 %v1257
    %v1991 = vunpack.c.h.b16 %v1257
    %v1992 = vunpack.c.l.b16 %v1258
    %v1993 = vunpack.c.h.b16 %v1258
    %v1994 = vunpack.c.l.b16 %v1259
    %v1995 = vunpack.c.h.b16 %v1259
    %v1996 = vunpack.c.l.b16 %v1260
    %v1997 = vunpack.c.h.b16 %v1260
    %v1998 = vunpack.c.l.b16 %v1261
    %v1999 = vunpack.c.h.b16 %v1261
    %v2000 = vunpack.c.l.b16 %v1262
    %v2001 = vunpack.c.h.b16 %v1262
    %v2002 = vunpack.c.l.b16 %v1263
    %v2003 = vunpack.c.h.b16 %v1263
    %v2004 = vunpack.c.l.b16 %v1264
    %v2005 = vunpack.c.h.b16 %v1264
    %v2006 = vunpack.c.l.b16 %v1265
    %v2007 = vunpack.c.h.b16 %v1265
    %v2008 = vunpack.c.l.b16 %v1266
    %v2009 = vunpack.c.h.b16 %v1266
    %v2010 = vunpack.c.l.b16 %v1267
    %v2011 = vunpack.c.h.b16 %v1267
    %v2012 = vunpack.c.l.b16 %v1268
    %v2013 = vunpack.c.h.b16 %v1268
    %v2014 = vunpack.c.l.b16 %v1269
    %v2015 = vunpack.c.h.b16 %v1269
    %v2016 = vunpack.c.l.b16 %v1270
    %v2017 = vunpack.c.h.b16 %v1270
    %v2018 = vunpack.c.l.b16 %v1271
    %v2019 = vunpack.c.h.b16 %v1271
    %v2020 = vunpack.c.l.b16 %v1272
    %v2021 = vunpack.c.h.b16 %v1272
    %v2022 = vunpack.c.l.b16 %v1273
    %v2023 = vunpack.c.h.b16 %v1273
    %v2024 = vunpack.c.l.b16 %v1274
    %v2025 = vunpack.c.h.b16 %v1274
    %v2026 = vunpack.c.l.b16 %v1275
    %v2027 = vunpack.c.h.b16 %v1275
    %v2028 = vunpack.c.l.b16 %v1276
    %v2029 = vunpack.c.h.b16 %v1276
    %v2030 = vunpack.c.l.b16 %v1277
    %v2031 = vunpack.c.h.b16 %v1277
    %v2032 = vunpack.c.l.b16 %v1278
    %v2033 = vunpack.c.h.b16 %v1278
    %v2034 = vunpack.c.l.b16 %v1279
    %v2035 = vunpack.c.h.b16 %v1279
    %v2036 = vunpack.c.l.b16 %v1280
    %v2037 = vunpack.c.h.b16 %v1280
    %v2038 = vunpack.c.l.b16 %v1281
    %v2039 = vunpack.c.h.b16 %v1281
    %v2040 = vunpack.c.l.b16 %v1282
    %v2041 = vunpack.c.h.b16 %v1282
    %v2042 = vunpack.c.l.b16 %v1283
    %v2043 = vunpack.c.h.b16 %v1283
    %v2044 = vunpack.c.l.b16 %v1284
    %v2045 = vunpack.c.h.b16 %v1284
    %v2046 = vunpack.c.l.b16 %v1285
    %v2047 = vunpack.c.h.b16 %v1285
    %v2048 = vunpack.c.l.b16 %v1286
    %v2049 = vunpack.c.h.b16 %v1286
    %v2050 = vunpack.c.l.b16 %v1287
    %v2051 = vunpack.c.h.b16 %v1287
    %v2052 = vunpack.c.l.b16 %v1288
    %v2053 = vunpack.c.h.b16 %v1288
    %v2054 = vunpack.c.l.b16 %v1289
    %v2055 = vunpack.c.h.b16 %v1289
    %v2056 = vunpack.c.l.b16 %v1290
    %v2057 = vunpack.c.h.b16 %v1290
    %v2058 = vunpack.c.l.b16 %v1291
    %v2059 = vunpack.c.h.b16 %v1291
    %v2060 = vunpack.c.l.b16 %v1292
    %v2061 = vunpack.c.h.b16 %v1292
    %v2062 = vunpack.c.l.b16 %v1293
    %v2063 = vunpack.c.h.b16 %v1293
    %v2064 = vunpack.c.l.b16 %v1294
    %v2065 = vunpack.c.h.b16 %v1294
    %v2066 = vunpack.c.l.b16 %v1295
    %v2067 = vunpack.c.h.b16 %v1295
    %v2068 = vunpack.c.l.b16 %v1296
    %v2069 = vunpack.c.h.b16 %v1296
    %v2070 = vunpack.c.l.b16 %v1297
    %v2071 = vunpack.c.h.b16 %v1297
    %v2072 = vunpack.c.l.b16 %v1298
    %v2073 = vunpack.c.h.b16 %v1298
    %v2074 = vunpack.c.l.b16 %v1299
    %v2075 = vunpack.c.h.b16 %v1299
    %v2076 = vunpack.c.l.b16 %v1300
    %v2077 = vunpack.c.h.b16 %v1300
    %v2078 = vunpack.c.l.b16 %v1301
    %v2079 = vunpack.c.h.b16 %v1301
    %v2080 = vunpack.c.l.b16 %v1302
    %v2081 = vunpack.c.h.b16 %v1302
    %v2082 = vunpack.c.l.b16 %v1303
    %v2083 = vunpack.c.h.b16 %v1303
    %v2084 = vunpack.c.l.b16 %v1304
    %v2085 = vunpack.c.h.b16 %v1304
    %v2086 = vunpack.c.l.b16 %v1305
    %v2087 = vunpack.c.h.b16 %v1305
    %v2088 = vunpack.c.l.b16 %v1306
    %v2089 = vunpack.c.h.b16 %v1306
    %v2090 = vunpack.c.l.b16 %v1307
    %v2091 = vunpack.c.h.b16 %v1307
    %v2092 = vunpack.c.l.b16 %v1308
    %v2093 = vunpack.c.h.b16 %v1308
    %v2094 = vunpack.c.l.b16 %v1309
    %v2095 = vunpack.c.h.b16 %v1309
    %v2096 = vunpack.c.l.b16 %v1310
    %v2097 = vunpack.c.h.b16 %v1310
    %v2098 = vunpack.c.l.b16 %v1311
    %v2099 = vunpack.c.h.b16 %v1311
    %v2100 = vunpack.c.l.b16 %v1312
    %v2101 = vunpack.c.h.b16 %v1312
    %v2102 = vunpack.c.l.b16 %v1313
    %v2103 = vunpack.c.h.b16 %v1313
    %v2104 = vunpack.c.l.b16 %v1314
    %v2105 = vunpack.c.h.b16 %v1314
    %v2106 = vunpack.c.l.b16 %v1315
    %v2107 = vunpack.c.h.b16 %v1315
    %v2108 = vunpack.c.l.b16 %v1316
    %v2109 = vunpack.c.h.b16 %v1316
    %v2110 = vunpack.c.l.b16 %v1317
    %v2111 = vunpack.c.h.b16 %v1317
    %v2112 = vunpack.c.l.b16 %v1318
    %v2113 = vunpack.c.h.b16 %v1318
    %v2114 = vunpack.c.l.b16 %v1319
    %v2115 = vunpack.c.h.b16 %v1319
    %v2116 = vunpack.c.l.b16 %v1320
    %v2117 = vunpack.c.h.b16 %v1320
    %v2118 = vunpack.c.l.b16 %v1321
    %v2119 = vunpack.c.h.b16 %v1321
    %v2120 = vunpack.c.l.b16 %v1322
    %v2121 = vunpack.c.h.b16 %v1322
    %v2122 = vunpack.c.l.b16 %v1323
    %v2123 = vunpack.c.h.b16 %v1323
    %v2124 = vunpack.c.l.b16 %v1324
    %v2125 = vunpack.c.h.b16 %v1324
    %v2126 = vunpack.c.l.b16 %v1325
    %v2127 = vunpack.c.h.b16 %v1325
    %v2128 = vunpack.c.l.b16 %v1326
    %v2129 = vunpack.c.h.b16 %v1326
    %v2130 = vunpack.c.l.b16 %v1327
    %v2131 = vunpack.c.h.b16 %v1327
    %v2132 = vunpack.c.l.b16 %v1328
    %v2133 = vunpack.c.h.b16 %v1328
    %v2134 = vunpack.c.l.b16 %v1329
    %v2135 = vunpack.c.h.b16 %v1329
    %v2136 = vunpack.c.l.b16 %v1330
    %v2137 = vunpack.c.h.b16 %v1330
    %v2138 = vunpack.c.l.b16 %v1331
    %v2139 = vunpack.c.h.b16 %v1331
    %v2140 = vunpack.c.l.b16 %v1332
    %v2141 = vunpack.c.h.b16 %v1332
    %v2142 = vunpack.c.l.b16 %v1333
    %v2143 = vunpack.c.h.b16 %v1333
    %v2144 = vpack.c.b16 %v1640, %v1632
    %v2145 = vpack.c.b16 %v1641, %v1633
    %v2146 = vpack.c.b16 %v1642, %v1634
    %v2147 = vpack.c.b16 %v1643, %v1635
    %v2148 = vpack.c.b16 %v1644, %v1636
    %v2149 = vpack.c.b16 %v1645, %v1637
    %v2150 = vpack.c.b16 %v1646, %v1638
    %v2151 = vpack.c.b16 %v1647, %v1639
    %v2152 = vpack.c.b16 %v1656, %v1648
    %v2153 = vpack.c.b16 %v1657, %v1649
    %v2154 = vpack.c.b16 %v1658, %v1650
    %v2155 = vpack.c.b16 %v1659, %v1651
    %v2156 = vpack.c.b16 %v1660, %v1652
    %v2157 = vpack.c.b16 %v1661, %v1653
    %v2158 = vpack.c.b16 %v1662, %v1654
    %v2159 = vpack.c.b16 %v1663, %v1655
    %v2160 = vpack.c.b16 %v1672, %v1664
    %v2161 = vpack.c.b16 %v1673, %v1665
    %v2162 = vpack.c.b16 %v1674, %v1666
    %v2163 = vpack.c.b16 %v1675, %v1667
    %v2164 = vpack.c.b16 %v1676, %v1668
    %v2165 = vpack.c.b16 %v1677, %v1669
    %v2166 = vpack.c.b16 %v1678, %v1670
    %v2167 = vpack.c.b16 %v1679, %v1671
    %v2168 = vpack.c.b16 %v1688, %v1680
    %v2169 = vpack.c.b16 %v1689, %v1681
    %v2170 = vpack.c.b16 %v1690, %v1682
    %v2171 = vpack.c.b16 %v1691, %v1683
    %v2172 = vpack.c.b16 %v1692, %v1684
    %v2173 = vpack.c.b16 %v1693, %v1685
    %v2174 = vpack.c.b16 %v1694, %v1686
    %v2175 = vpack.c.b16 %v1695, %v1687
    %v2176 = vpack.c.b16 %v1704, %v1696
    %v2177 = vpack.c.b16 %v1705, %v1697
    %v2178 = vpack.c.b16 %v1706, %v1698
    %v2179 = vpack.c.b16 %v1707, %v1699
    %v2180 = vpack.c.b16 %v1708, %v1700
    %v2181 = vpack.c.b16 %v1709, %v1701
    %v2182 = vpack.c.b16 %v1710, %v1702
    %v2183 = vpack.c.b16 %v1711, %v1703
    %v2184 = vpack.c.b16 %v1720, %v1712
    %v2185 = vpack.c.b16 %v1721, %v1713
    %v2186 = vpack.c.b16 %v1722, %v1714
    %v2187 = vpack.c.b16 %v1723, %v1715
    %v2188 = vpack.c.b16 %v1724, %v1716
    %v2189 = vpack.c.b16 %v1725, %v1717
    %v2190 = vpack.c.b16 %v1726, %v1718
    %v2191 = vpack.c.b16 %v1727, %v1719
    %v2192 = vpack.c.b16 %v1736, %v1728
    %v2193 = vpack.c.b16 %v1737, %v1729
    %v2194 = vpack.c.b16 %v1738, %v1730
    %v2195 = vpack.c.b16 %v1739, %v1731
    %v2196 = vpack.c.b16 %v1740, %v1732
    %v2197 = vpack.c.b16 %v1741, %v1733
    %v2198 = vpack.c.b16 %v1742, %v1734
    %v2199 = vpack.c.b16 %v1743, %v1735
    %v2200 = vpack.c.b16 %v1752, %v1744
    %v2201 = vpack.c.b16 %v1753, %v1745
    %v2202 = vpack.c.b16 %v1754, %v1746
    %v2203 = vpack.c.b16 %v1755, %v1747
    %v2204 = vpack.c.b16 %v1756, %v1748
    %v2205 = vpack.c.b16 %v1757, %v1749
    %v2206 = vpack.c.b16 %v1758, %v1750
    %v2207 = vpack.c.b16 %v1759, %v1751
    %v2208 = vpack.c.b16 %v1768, %v1760
    %v2209 = vpack.c.b16 %v1769, %v1761
    %v2210 = vpack.c.b16 %v1770, %v1762
    %v2211 = vpack.c.b16 %v1771, %v1763
    %v2212 = vpack.c.b16 %v1772, %v1764
    %v2213 = vpack.c.b16 %v1773, %v1765
    %v2214 = vpack.c.b16 %v1774, %v1766
    %v2215 = vpack.c.b16 %v1775, %v1767
    %v2216 = vpack.c.b16 %v1784, %v1776
    %v2217 = vpack.c.b16 %v1785, %v1777
    %v2218 = vpack.c.b16 %v1786, %v1778
    %v2219 = vpack.c.b16 %v1787, %v1779
    %v2220 = vpack.c.b16 %v1788, %v1780
    %v2221 = vpack.c.b16 %v1789, %v1781
    %v2222 = vpack.c.b16 %v1790, %v1782
    %v2223 = vpack.c.b16 %v1791, %v1783
    %v2224 = vpack.c.b16 %v1800, %v1792
    %v2225 = vpack.c.b16 %v1801, %v1793
    %v2226 = vpack.c.b16 %v1802, %v1794
    %v2227 = vpack.c.b16 %v1803, %v1795
    %v2228 = vpack.c.b16 %v1804, %v1796
    %v2229 = vpack.c.b16 %v1805, %v1797
    %v2230 = vpack.c.b16 %v1806, %v1798
    %v2231 = vpack.c.b16 %v1807, %v1799
    %v2232 = vpack.c.b16 %v1816, %v1808
    %v2233 = vpack.c.b16 %v1817, %v1809
    %v2234 = vpack.c.b16 %v1818, %v1810
    %v2235 = vpack.c.b16 %v1819, %v1811
    %v2236 = vpack.c.b16 %v1820, %v1812
    %v2237 = vpack.c.b16 %v1821, %v1813
    %v2238 = vpack.c.b16 %v1822, %v1814
    %v2239 = vpack.c.b16 %v1823, %v1815
    %v2240 = vpack.c.b16 %v1832, %v1824
    %v2241 = vpack.c.b16 %v1833, %v1825
    %v2242 = vpack.c.b16 %v1834, %v1826
    %v2243 = vpack.c.b16 %v1835, %v1827
    %v2244 = vpack.c.b16 %v1836, %v1828
    %v2245 = vpack.c.b16 %v1837, %v1829
    %v2246 = vpack.c.b16 %v1838, %v1830
    %v2247 = vpack.c.b16 %v1839, %v1831
    %v2248 = vpack.c.b16 %v1848, %v1840
    %v2249 = vpack.c.b16 %v1849, %v1841
    %v2250 = vpack.c.b16 %v1850, %v1842
    %v2251 = vpack.c.b16 %v1851, %v1843
    %v2252 = vpack.c.b16 %v1852, %v1844
    %v2253 = vpack.c.b16 %v1853, %v1845
    %v2254 = vpack.c.b16 %v1854, %v1846
    %v2255 = vpack.c.b16 %v1855, %v1847
    %v2256 = vpack.c.b16 %v1864, %v1856
    %v2257 = vpack.c.b16 %v1865, %v1857
    %v2258 = vpack.c.b16 %v1866, %v1858
    %v2259 = vpack.c.b16 %v1867, %v1859
    %v2260 = vpack.c.b16 %v1868, %v1860
    %v2261 = vpack.c.b16 %v1869, %v1861
    %v2262 = vpack.c.b16 %v1870, %v1862
    %v2263 = vpack.c.b16 %v1871, %v1863
    %v2264 = vpack.c.b16 %v1880, %v1872
    %v2265 = vpack.c.b16 %v1881, %v1873
    %v2266 = vpack.c.b16 %v1882, %v1874
    %v2267 = vpack.c.b16 %v1883, %v1875
    %v2268 = vpack.c.b16 %v1884, %v1876
    %v2269 = vpack.c.b16 %v1885, %v1877
    %v2270 = vpack.c.b16 %v1886, %v1878
    %v2271 = vpack.c.b16 %v1887, %v1879
    %v2272 = vpack.c.b16 %v1896, %v1888
    %v2273 = vpack.c.b16 %v1897, %v1889
    %v2274 = vpack.c.b16 %v1898, %v1890
    %v2275 = vpack.c.b16 %v1899, %v1891
    %v2276 = vpack.c.b16 %v1900, %v1892
    %v2277 = vpack.c.b16 %v1901, %v1893
    %v2278 = vpack.c.b16 %v1902, %v1894
    %v2279 = vpack.c.b16 %v1903, %v1895
    %v2280 = vpack.c.b16 %v1912, %v1904
    %v2281 = vpack.c.b16 %v1913, %v1905
    %v2282 = vpack.c.b16 %v1914, %v1906
    %v2283 = vpack.c.b16 %v1915, %v1907
    %v2284 = vpack.c.b16 %v1916, %v1908
    %v2285 = vpack.c.b16 %v1917, %v1909
    %v2286 = vpack.c.b16 %v1918, %v1910
    %v2287 = vpack.c.b16 %v1919, %v1911
    %v2288 = vpack.c.b16 %v1928, %v1920
    %v2289 = vpack.c.b16 %v1929, %v1921
    %v2290 = vpack.c.b16 %v1930, %v1922
    %v2291 = vpack.c.b16 %v1931, %v1923
    %v2292 = vpack.c.b16 %v1932, %v1924
    %v2293 = vpack.c.b16 %v1933, %v1925
    %v2294 = vpack.c.b16 %v1934, %v1926
    %v2295 = vpack.c.b16 %v1935, %v1927
    %v2296 = vpack.c.b16 %v1944, %v1936
    %v2297 = vpack.c.b16 %v1945, %v1937
    %v2298 = vpack.c.b16 %v1946, %v1938
    %v2299 = vpack.c.b16 %v1947, %v1939
    %v2300 = vpack.c.b16 %v1948, %v1940
    %v2301 = vpack.c.b16 %v1949, %v1941
    %v2302 = vpack.c.b16 %v1950, %v1942
    %v2303 = vpack.c.b16 %v1951, %v1943
    %v2304 = vpack.c.b16 %v1960, %v1952
    %v2305 = vpack.c.b16 %v1961, %v1953
    %v2306 = vpack.c.b16 %v1962, %v1954
    %v2307 = vpack.c.b16 %v1963, %v1955
    %v2308 = vpack.c.b16 %v1964, %v1956
    %v2309 = vpack.c.b16 %v1965, %v1957
    %v2310 = vpack.c.b16 %v1966, %v1958
    %v2311 = vpack.c.b16 %v1967, %v1959
    %v2312 = vpack.c.b16 %v1976, %v1968
    %v2313 = vpack.c.b16 %v1977, %v1969
    %v2314 = vpack.c.b16 %v1978, %v1970
    %v2315 = vpack.c.b16 %v1979, %v1971
    %v2316 = vpack.c.b16 %v1980, %v1972
    %v2317 = vpack.c.b16 %v1981, %v1973
    %v2318 = vpack.c.b16 %v1982, %v1974
    %v2319 = vpack.c.b16 %v1983, %v1975
    %v2320 = vpack.c.b16 %v1992, %v1984
    %v2321 = vpack.c.b16 %v1993, %v1985
    %v2322 = vpack.c.b16 %v1994, %v1986
    %v2323 = vpack.c.b16 %v1995, %v1987
    %v2324 = vpack.c.b16 %v1996, %v1988
    %v2325 = vpack.c.b16 %v1997, %v1989
    %v2326 = vpack.c.b16 %v1998, %v1990
    %v2327 = vpack.c.b16 %v1999, %v1991
    %v2328 = vpack.c.b16 %v2008, %v2000
    %v2329 = vpack.c.b16 %v2009, %v2001
    %v2330 = vpack.c.b16 %v2010, %v2002
    %v2331 = vpack.c.b16 %v2011, %v2003
    %v2332 = vpack.c.b16 %v2012, %v2004
    %v2333 = vpack.c.b16 %v2013, %v2005
    %v2334 = vpack.c.b16 %v2014, %v2006
    %v2335 = vpack.c.b16 %v2015, %v2007
    %v2336 = vpack.c.b16 %v2024, %v2016
    %v2337 = vpack.c.b16 %v2025, %v2017
    %v2338 = vpack.c.b16 %v2026, %v2018
    %v2339 = vpack.c.b16 %v2027, %v2019
    %v2340 = vpack.c.b16 %v2028, %v2020
    %v2341 = vpack.c.b16 %v2029, %v2021
    %v2342 = vpack.c.b16 %v2030, %v2022
    %v2343 = vpack.c.b16 %v2031, %v2023
    %v2344 = vpack.c.b16 %v2040, %v2032
    %v2345 = vpack.c.b16 %v2041, %v2033
    %v2346 = vpack.c.b16 %v2042, %v2034
    %v2347 = vpack.c.b16 %v2043, %v2035
    %v2348 = vpack.c.b16 %v2044, %v2036
    %v2349 = vpack.c.b16 %v2045, %v2037
    %v2350 = vpack.c.b16 %v2046, %v2038
    %v2351 = vpack.c.b16 %v2047, %v2039
    %v2352 = vpack.c.b16 %v2056, %v2048
    %v2353 = vpack.c.b16 %v2057, %v2049
    %v2354 = vpack.c.b16 %v2058, %v2050
    %v2355 = vpack.c.b16 %v2059, %v2051
    %v2356 = vpack.c.b16 %v2060, %v2052
    %v2357 = vpack.c.b16 %v2061, %v2053
    %v2358 = vpack.c.b16 %v2062, %v2054
    %v2359 = vpack.c.b16 %v2063, %v2055
    %v2360 = vpack.c.b16 %v2072, %v2064
    %v2361 = vpack.c.b16 %v2073, %v2065
    %v2362 = vpack.c.b16 %v2074, %v2066
    %v2363 = vpack.c.b16 %v2075, %v2067
    %v2364 = vpack.c.b16 %v2076, %v2068
    %v2365 = vpack.c.b16 %v2077, %v2069
    %v2366 = vpack.c.b16 %v2078, %v2070
    %v2367 = vpack.c.b16 %v2079, %v2071
    %v2368 = vpack.c.b16 %v2088, %v2080
    %v2369 = vpack.c.b16 %v2089, %v2081
    %v2370 = vpack.c.b16 %v2090, %v2082
    %v2371 = vpack.c.b16 %v2091, %v2083
    %v2372 = vpack.c.b16 %v2092, %v2084
    %v2373 = vpack.c.b16 %v2093, %v2085
    %v2374 = vpack.c.b16 %v2094, %v2086
    %v2375 = vpack.c.b16 %v2095, %v2087
    %v2376 = vpack.c.b16 %v2104, %v2096
    %v2377 = vpack.c.b16 %v2105, %v2097
    %v2378 = vpack.c.b16 %v2106, %v2098
    %v2379 = vpack.c.b16 %v2107, %v2099
    %v2380 = vpack.c.b16 %v2108, %v2100
    %v2381 = vpack.c.b16 %v2109, %v2101
    %v2382 = vpack.c.b16 %v2110, %v2102
    %v2383 = vpack.c.b16 %v2111, %v2103
    %v2384 = vpack.c.b16 %v2120, %v2112
    %v2385 = vpack.c.b16 %v2121, %v2113
    %v2386 = vpack.c.b16 %v2122, %v2114
    %v2387 = vpack.c.b16 %v2123, %v2115
    %v2388 = vpack.c.b16 %v2124, %v2116
    %v2389 = vpack.c.b16 %v2125, %v2117
    %v2390 = vpack.c.b16 %v2126, %v2118
    %v2391 = vpack.c.b16 %v2127, %v2119
    %v2392 = vpack.c.b16 %v2136, %v2128
    %v2393 = vpack.c.b16 %v2137, %v2129
    %v2394 = vpack.c.b16 %v2138, %v2130
    %v2395 = vpack.c.b16 %v2139, %v2131
    %v2396 = vpack.c.b16 %v2140, %v2132
    %v2397 = vpack.c.b16 %v2141, %v2133
    %v2398 = vpack.c.b16 %v2142, %v2134
    %v2399 = vpack.c.b16 %v2143, %v2135
    %2656 = vmatprep.subr.bf16.mxu0 %v2145
    %2657 = vmatpush1.bf16.msra.mxu0 %v2144
    %2658 = vmatprep.subr.bf16.mxu0 %v2153
    %2659 = vmatpush1.bf16.msra.mxu0 %v2152
    %2660 = vmatprep.subr.bf16.mxu0 %v2161
    %2661 = vmatpush1.bf16.msra.mxu0 %v2160
    %2662 = vmatprep.subr.bf16.mxu0 %v2169
    %2663 = vmatpush1.bf16.msra.mxu0 %v2168
    %2664 = vmatprep.subr.bf16.mxu0 %v2177
    %2665 = vmatpush1.bf16.msra.mxu0 %v2176
    %2666 = vmatprep.subr.bf16.mxu0 %v2185
    %2667 = vmatpush1.bf16.msra.mxu0 %v2184
    %2668 = vmatprep.subr.bf16.mxu0 %v2193
    %2669 = vmatpush1.bf16.msra.mxu0 %v2192
    %2670 = vmatprep.subr.bf16.mxu0 %v2201
    %2671 = vmatpush1.bf16.msra.mxu0 %v2200
    %2672 = vmatprep.subr.bf16.mxu0 %v2209
    %2673 = vmatpush1.bf16.msra.mxu0 %v2208
    %2674 = vmatprep.subr.bf16.mxu0 %v2217
    %2675 = vmatpush1.bf16.msra.mxu0 %v2216
    %2676 = vmatprep.subr.bf16.mxu0 %v2225
    %2677 = vmatpush1.bf16.msra.mxu0 %v2224
    %2678 = vmatprep.subr.bf16.mxu0 %v2233
    %2679 = vmatpush1.bf16.msra.mxu0 %v2232
    %2680 = vmatprep.subr.bf16.mxu0 %v2241
    %2681 = vmatpush1.bf16.msra.mxu0 %v2240
    %2682 = vmatprep.subr.bf16.mxu0 %v2249
    %2683 = vmatpush1.bf16.msra.mxu0 %v2248
    %2684 = vmatprep.subr.bf16.mxu0 %v2257
    %2685 = vmatpush1.bf16.msra.mxu0 %v2256
    %2686 = vmatprep.subr.bf16.mxu0 %v2265
    %2687 = vmatpush1.bf16.msra.mxu0 %v2264
    %2688 = vmatprep.mubr.bf16.mxu0 %v1075
    %2689 = vmatmul.mubr.bf16.gmra.mrb[0].mxu0 %v1074
    %v2690 = vpop.f32.mrb[0].mxu0
    %v2691 = vadd.f32 %v1339, %v2690
    %v2692 = vpop.f32.mrb[0].mxu0
    %v2693 = vadd.f32 %v1343, %v2692
    %v2694 = vpop.f32.mrb[0].mxu0
    %v2695 = vadd.f32 %v1339, %v2694
    %v2696 = vpop.f32.mrb[0].mxu0
    %v2697 = vadd.f32 %v1343, %v2696
    %2698 = vdwg.mxu0
    %2699 = vmatprep.subr.bf16.mxu0 %v2273
    %2700 = vmatpush1.bf16.msra.mxu0 %v2272
    %2701 = vmatprep.subr.bf16.mxu0 %v2281
    %2702 = vmatpush1.bf16.msra.mxu0 %v2280
    %2703 = vmatprep.subr.bf16.mxu0 %v2289
    %2704 = vmatpush1.bf16.msra.mxu0 %v2288
    %2705 = vmatprep.subr.bf16.mxu0 %v2297
    %2706 = vmatpush1.bf16.msra.mxu0 %v2296
    %2707 = vmatprep.subr.bf16.mxu0 %v2305
    %2708 = vmatpush1.bf16.msra.mxu0 %v2304
    %2709 = vmatprep.subr.bf16.mxu0 %v2313
    %2710 = vmatpush1.bf16.msra.mxu0 %v2312
    %2711 = vmatprep.subr.bf16.mxu0 %v2321
    %2712 = vmatpush1.bf16.msra.mxu0 %v2320
    %2713 = vmatprep.subr.bf16.mxu0 %v2329
    %2714 = vmatpush1.bf16.msra.mxu0 %v2328
    %2715 = vmatprep.subr.bf16.mxu0 %v2337
    %2716 = vmatpush1.bf16.msra.mxu0 %v2336
    %2717 = vmatprep.subr.bf16.mxu0 %v2345
    %2718 = vmatpush1.bf16.msra.mxu0 %v2344
    %2719 = vmatprep.subr.bf16.mxu0 %v2353
    %2720 = vmatpush1.bf16.msra.mxu0 %v2352
    %2721 = vmatprep.subr.bf16.mxu0 %v2361
    %2722 = vmatpush1.bf16.msra.mxu0 %v2360
    %2723 = vmatprep.subr.bf16.mxu0 %v2369
    %2724 = vmatpush1.bf16.msra.mxu0 %v2368
    %2725 = vmatprep.subr.bf16.mxu0 %v2377
    %2726 = vmatpush1.bf16.msra.mxu0 %v2376
    %2727 = vmatprep.subr.bf16.mxu0 %v2385
    %2728 = vmatpush1.bf16.msra.mxu0 %v2384
    %2729 = vmatprep.subr.bf16.mxu0 %v2393
    %2730 = vmatpush1.bf16.msra.mxu0 %v2392
    %2731 = vmatprep.mubr.bf16.mxu0 %v1077
    %2732 = vmatmul.mubr.bf16.gmra.mrb[0].mxu0 %v1076
    %v2733 = vpop.f32.mrb[0].mxu0
    %v2734 = vadd.f32 %v2691, %v2733
    %v2735 = vpop.f32.mrb[0].mxu0
    %v2736 = vadd.f32 %v2693, %v2735
    %v2737 = vpop.f32.mrb[0].mxu0
    %v2738 = vadd.f32 %v2695, %v2737
    %v2739 = vpop.f32.mrb[0].mxu0
    %v2740 = vadd.f32 %v2697, %v2739
    %2741 = vdwg.mxu0
    %2742 = vmatprep.subr.bf16.mxu0 %v2147
    %2743 = vmatpush1.bf16.msra.mxu0 %v2146
    %2744 = vmatprep.subr.bf16.mxu0 %v2155
    %2745 = vmatpush1.bf16.msra.mxu0 %v2154
    %2746 = vmatprep.subr.bf16.mxu0 %v2163
    %2747 = vmatpush1.bf16.msra.mxu0 %v2162
    %2748 = vmatprep.subr.bf16.mxu0 %v2171
    %2749 = vmatpush1.bf16.msra.mxu0 %v2170
    %2750 = vmatprep.subr.bf16.mxu0 %v2179
    %2751 = vmatpush1.bf16.msra.mxu0 %v2178
    %2752 = vmatprep.subr.bf16.mxu0 %v2187
    %2753 = vmatpush1.bf16.msra.mxu0 %v2186
    %2754 = vmatprep.subr.bf16.mxu0 %v2195
    %2755 = vmatpush1.bf16.msra.mxu0 %v2194
    %2756 = vmatprep.subr.bf16.mxu0 %v2203
    %2757 = vmatpush1.bf16.msra.mxu0 %v2202
    %2758 = vmatprep.subr.bf16.mxu0 %v2211
    %2759 = vmatpush1.bf16.msra.mxu0 %v2210
    %2760 = vmatprep.subr.bf16.mxu0 %v2219
    %2761 = vmatpush1.bf16.msra.mxu0 %v2218
    %2762 = vmatprep.subr.bf16.mxu0 %v2227
    %2763 = vmatpush1.bf16.msra.mxu0 %v2226
    %2764 = vmatprep.subr.bf16.mxu0 %v2235
    %2765 = vmatpush1.bf16.msra.mxu0 %v2234
    %2766 = vmatprep.subr.bf16.mxu0 %v2243
    %2767 = vmatpush1.bf16.msra.mxu0 %v2242
    %2768 = vmatprep.subr.bf16.mxu0 %v2251
    %2769 = vmatpush1.bf16.msra.mxu0 %v2250
    %2770 = vmatprep.subr.bf16.mxu0 %v2259
    %2771 = vmatpush1.bf16.msra.mxu0 %v2258
    %2772 = vmatprep.subr.bf16.mxu0 %v2267
    %2773 = vmatpush1.bf16.msra.mxu0 %v2266
    %2774 = vmatprep.mubr.bf16.mxu0 %v1075
    %2775 = vmatmul.mubr.bf16.gmra.mrb[0].mxu0 %v1074
    %v2776 = vpop.f32.mrb[0].mxu0
    %v2777 = vadd.f32 %v1347, %v2776
    %v2778 = vpop.f32.mrb[0].mxu0
    %v2779 = vadd.f32 %v1351, %v2778
    %v2780 = vpop.f32.mrb[0].mxu0
    %v2781 = vadd.f32 %v1347, %v2780
    %v2782 = vpop.f32.mrb[0].mxu0
    %v2783 = vadd.f32 %v1351, %v2782
    %2784 = vdwg.mxu0
    %2785 = vmatprep.subr.bf16.mxu0 %v2275
    %2786 = vmatpush1.bf16.msra.mxu0 %v2274
    %2787 = vmatprep.subr.bf16.mxu0 %v2283
    %2788 = vmatpush1.bf16.msra.mxu0 %v2282
    %2789 = vmatprep.subr.bf16.mxu0 %v2291
    %2790 = vmatpush1.bf16.msra.mxu0 %v2290
    %2791 = vmatprep.subr.bf16.mxu0 %v2299
    %2792 = vmatpush1.bf16.msra.mxu0 %v2298
    %2793 = vmatprep.subr.bf16.mxu0 %v2307
    %2794 = vmatpush1.bf16.msra.mxu0 %v2306
    %2795 = vmatprep.subr.bf16.mxu0 %v2315
    %2796 = vmatpush1.bf16.msra.mxu0 %v2314
    %2797 = vmatprep.subr.bf16.mxu0 %v2323
    %2798 = vmatpush1.bf16.msra.mxu0 %v2322
    %2799 = vmatprep.subr.bf16.mxu0 %v2331
    %2800 = vmatpush1.bf16.msra.mxu0 %v2330
    %2801 = vmatprep.subr.bf16.mxu0 %v2339
    %2802 = vmatpush1.bf16.msra.mxu0 %v2338
    %2803 = vmatprep.subr.bf16.mxu0 %v2347
    %2804 = vmatpush1.bf16.msra.mxu0 %v2346
    %2805 = vmatprep.subr.bf16.mxu0 %v2355
    %2806 = vmatpush1.bf16.msra.mxu0 %v2354
    %2807 = vmatprep.subr.bf16.mxu0 %v2363
    %2808 = vmatpush1.bf16.msra.mxu0 %v2362
    %2809 = vmatprep.subr.bf16.mxu0 %v2371
    %2810 = vmatpush1.bf16.msra.mxu0 %v2370
    %2811 = vmatprep.subr.bf16.mxu0 %v2379
    %2812 = vmatpush1.bf16.msra.mxu0 %v2378
    %2813 = vmatprep.subr.bf16.mxu0 %v2387
    %2814 = vmatpush1.bf16.msra.mxu0 %v2386
    %2815 = vmatprep.subr.bf16.mxu0 %v2395
    %2816 = vmatpush1.bf16.msra.mxu0 %v2394
    %2817 = vmatprep.mubr.bf16.mxu0 %v1077
    %2818 = vmatmul.mubr.bf16.gmra.mrb[0].mxu0 %v1076
    %v2819 = vpop.f32.mrb[0].mxu0
    %v2820 = vadd.f32 %v2777, %v2819
    %v2821 = vpop.f32.mrb[0].mxu0
    %v2822 = vadd.f32 %v2779, %v2821
    %v2823 = vpop.f32.mrb[0].mxu0
    %v2824 = vadd.f32 %v2781, %v2823
    %v2825 = vpop.f32.mrb[0].mxu0
    %v2826 = vadd.f32 %v2783, %v2825
    %2827 = vdwg.mxu0
    %2828 = vmatprep.subr.bf16.mxu0 %v2149
    %2829 = vmatpush1.bf16.msra.mxu0 %v2148
    %2830 = vmatprep.subr.bf16.mxu0 %v2157
    %2831 = vmatpush1.bf16.msra.mxu0 %v2156
    %2832 = vmatprep.subr.bf16.mxu0 %v2165
    %2833 = vmatpush1.bf16.msra.mxu0 %v2164
    %2834 = vmatprep.subr.bf16.mxu0 %v2173
    %2835 = vmatpush1.bf16.msra.mxu0 %v2172
    %2836 = vmatprep.subr.bf16.mxu0 %v2181
    %2837 = vmatpush1.bf16.msra.mxu0 %v2180
    %2838 = vmatprep.subr.bf16.mxu0 %v2189
    %2839 = vmatpush1.bf16.msra.mxu0 %v2188
    %2840 = vmatprep.subr.bf16.mxu0 %v2197
    %2841 = vmatpush1.bf16.msra.mxu0 %v2196
    %2842 = vmatprep.subr.bf16.mxu0 %v2205
    %2843 = vmatpush1.bf16.msra.mxu0 %v2204
    %2844 = vmatprep.subr.bf16.mxu0 %v2213
    %2845 = vmatpush1.bf16.msra.mxu0 %v2212
    %2846 = vmatprep.subr.bf16.mxu0 %v2221
    %2847 = vmatpush1.bf16.msra.mxu0 %v2220
    %2848 = vmatprep.subr.bf16.mxu0 %v2229
    %2849 = vmatpush1.bf16.msra.mxu0 %v2228
    %2850 = vmatprep.subr.bf16.mxu0 %v2237
    %2851 = vmatpush1.bf16.msra.mxu0 %v2236
    %2852 = vmatprep.subr.bf16.mxu0 %v2245
    %2853 = vmatpush1.bf16.msra.mxu0 %v2244
    %2854 = vmatprep.subr.bf16.mxu0 %v2253
    %2855 = vmatpush1.bf16.msra.mxu0 %v2252
    %2856 = vmatprep.subr.bf16.mxu0 %v2261
    %2857 = vmatpush1.bf16.msra.mxu0 %v2260
    %2858 = vmatprep.subr.bf16.mxu0 %v2269
    %2859 = vmatpush1.bf16.msra.mxu0 %v2268
    %2860 = vmatprep.mubr.bf16.mxu0 %v1075
    %2861 = vmatmul.mubr.bf16.gmra.mrb[0].mxu0 %v1074
    %v2862 = vpop.f32.mrb[0].mxu0
    %v2863 = vadd.f32 %v1355, %v2862
    %v2864 = vpop.f32.mrb[0].mxu0
    %v2865 = vadd.f32 %v1359, %v2864
    %v2866 = vpop.f32.mrb[0].mxu0
    %v2867 = vadd.f32 %v1355, %v2866
    %v2868 = vpop.f32.mrb[0].mxu0
    %v2869 = vadd.f32 %v1359, %v2868
    %2870 = vdwg.mxu0
    %2871 = vmatprep.subr.bf16.mxu0 %v2277
    %2872 = vmatpush1.bf16.msra.mxu0 %v2276
    %2873 = vmatprep.subr.bf16.mxu0 %v2285
    %2874 = vmatpush1.bf16.msra.mxu0 %v2284
    %2875 = vmatprep.subr.bf16.mxu0 %v2293
    %2876 = vmatpush1.bf16.msra.mxu0 %v2292
    %2877 = vmatprep.subr.bf16.mxu0 %v2301
    %2878 = vmatpush1.bf16.msra.mxu0 %v2300
    %2879 = vmatprep.subr.bf16.mxu0 %v2309
    %2880 = vmatpush1.bf16.msra.mxu0 %v2308
    %2881 = vmatprep.subr.bf16.mxu0 %v2317
    %2882 = vmatpush1.bf16.msra.mxu0 %v2316
    %2883 = vmatprep.subr.bf16.mxu0 %v2325
    %2884 = vmatpush1.bf16.msra.mxu0 %v2324
    %2885 = vmatprep.subr.bf16.mxu0 %v2333
    %2886 = vmatpush1.bf16.msra.mxu0 %v2332
    %2887 = vmatprep.subr.bf16.mxu0 %v2341
    %2888 = vmatpush1.bf16.msra.mxu0 %v2340
    %2889 = vmatprep.subr.bf16.mxu0 %v2349
    %2890 = vmatpush1.bf16.msra.mxu0 %v2348
    %2891 = vmatprep.subr.bf16.mxu0 %v2357
    %2892 = vmatpush1.bf16.msra.mxu0 %v2356
    %2893 = vmatprep.subr.bf16.mxu0 %v2365
    %2894 = vmatpush1.bf16.msra.mxu0 %v2364
    %2895 = vmatprep.subr.bf16.mxu0 %v2373
    %2896 = vmatpush1.bf16.msra.mxu0 %v2372
    %2897 = vmatprep.subr.bf16.mxu0 %v2381
    %2898 = vmatpush1.bf16.msra.mxu0 %v2380
    %2899 = vmatprep.subr.bf16.mxu0 %v2389
    %2900 = vmatpush1.bf16.msra.mxu0 %v2388
    %2901 = vmatprep.subr.bf16.mxu0 %v2397
    %2902 = vmatpush1.bf16.msra.mxu0 %v2396
    %2903 = vmatprep.mubr.bf16.mxu0 %v1077
    %2904 = vmatmul.mubr.bf16.gmra.mrb[0].mxu0 %v1076
    %v2905 = vpop.f32.mrb[0].mxu0
    %v2906 = vadd.f32 %v2863, %v2905
    %v2907 = vpop.f32.mrb[0].mxu0
    %v2908 = vadd.f32 %v2865, %v2907
    %v2909 = vpop.f32.mrb[0].mxu0
    %v2910 = vadd.f32 %v2867, %v2909
    %v2911 = vpop.f32.mrb[0].mxu0
    %v2912 = vadd.f32 %v2869, %v2911
    %2913 = vdwg.mxu0
    %2914 = vmatprep.subr.bf16.mxu0 %v2151
    %2915 = vmatpush1.bf16.msra.mxu0 %v2150
    %2916 = vmatprep.subr.bf16.mxu0 %v2159
    %2917 = vmatpush1.bf16.msra.mxu0 %v2158
    %2918 = vmatprep.subr.bf16.mxu0 %v2167
    %2919 = vmatpush1.bf16.msra.mxu0 %v2166
    %2920 = vmatprep.subr.bf16.mxu0 %v2175
    %2921 = vmatpush1.bf16.msra.mxu0 %v2174
    %2922 = vmatprep.subr.bf16.mxu0 %v2183
    %2923 = vmatpush1.bf16.msra.mxu0 %v2182
    %2924 = vmatprep.subr.bf16.mxu0 %v2191
    %2925 = vmatpush1.bf16.msra.mxu0 %v2190
    %2926 = vmatprep.subr.bf16.mxu0 %v2199
    %2927 = vmatpush1.bf16.msra.mxu0 %v2198
    %2928 = vmatprep.subr.bf16.mxu0 %v2207
    %2929 = vmatpush1.bf16.msra.mxu0 %v2206
    %2930 = vmatprep.subr.bf16.mxu0 %v2215
    %2931 = vmatpush1.bf16.msra.mxu0 %v2214
    %2932 = vmatprep.subr.bf16.mxu0 %v2223
    %2933 = vmatpush1.bf16.msra.mxu0 %v2222
    %2934 = vmatprep.subr.bf16.mxu0 %v2231
    %2935 = vmatpush1.bf16.msra.mxu0 %v2230
    %2936 = vmatprep.subr.bf16.mxu0 %v2239
    %2937 = vmatpush1.bf16.msra.mxu0 %v2238
    %2938 = vmatprep.subr.bf16.mxu0 %v2247
    %2939 = vmatpush1.bf16.msra.mxu0 %v2246
    %2940 = vmatprep.subr.bf16.mxu0 %v2255
    %2941 = vmatpush1.bf16.msra.mxu0 %v2254
    %2942 = vmatprep.subr.bf16.mxu0 %v2263
    %2943 = vmatpush1.bf16.msra.mxu0 %v2262
    %2944 = vmatprep.subr.bf16.mxu0 %v2271
    %2945 = vmatpush1.bf16.msra.mxu0 %v2270
    %2946 = vmatprep.mubr.bf16.mxu0 %v1075
    %2947 = vmatmul.mubr.bf16.gmra.mrb[0].mxu0 %v1074
    %v2948 = vpop.f32.mrb[0].mxu0
    %v2949 = vadd.f32 %v1363, %v2948
    %v2950 = vpop.f32.mrb[0].mxu0
    %v2951 = vadd.f32 %v1367, %v2950
    %v2952 = vpop.f32.mrb[0].mxu0
    %v2953 = vadd.f32 %v1363, %v2952
    %v2954 = vpop.f32.mrb[0].mxu0
    %v2955 = vadd.f32 %v1367, %v2954
    %2956 = vdwg.mxu0
    %2957 = vmatprep.subr.bf16.mxu0 %v2279
    %2958 = vmatpush1.bf16.msra.mxu0 %v2278
    %2959 = vmatprep.subr.bf16.mxu0 %v2287
    %2960 = vmatpush1.bf16.msra.mxu0 %v2286
    %2961 = vmatprep.subr.bf16.mxu0 %v2295
    %2962 = vmatpush1.bf16.msra.mxu0 %v2294
    %2963 = vmatprep.subr.bf16.mxu0 %v2303
    %2964 = vmatpush1.bf16.msra.mxu0 %v2302
    %2965 = vmatprep.subr.bf16.mxu0 %v2311
    %2966 = vmatpush1.bf16.msra.mxu0 %v2310
    %2967 = vmatprep.subr.bf16.mxu0 %v2319
    %2968 = vmatpush1.bf16.msra.mxu0 %v2318
    %2969 = vmatprep.subr.bf16.mxu0 %v2327
    %2970 = vmatpush1.bf16.msra.mxu0 %v2326
    %2971 = vmatprep.subr.bf16.mxu0 %v2335
    %2972 = vmatpush1.bf16.msra.mxu0 %v2334
    %2973 = vmatprep.subr.bf16.mxu0 %v2343
    %2974 = vmatpush1.bf16.msra.mxu0 %v2342
    %2975 = vmatprep.subr.bf16.mxu0 %v2351
    %2976 = vmatpush1.bf16.msra.mxu0 %v2350
    %2977 = vmatprep.subr.bf16.mxu0 %v2359
    %2978 = vmatpush1.bf16.msra.mxu0 %v2358
    %2979 = vmatprep.subr.bf16.mxu0 %v2367
    %2980 = vmatpush1.bf16.msra.mxu0 %v2366
    %2981 = vmatprep.subr.bf16.mxu0 %v2375
    %2982 = vmatpush1.bf16.msra.mxu0 %v2374
    %2983 = vmatprep.subr.bf16.mxu0 %v2383
    %2984 = vmatpush1.bf16.msra.mxu0 %v2382
    %2985 = vmatprep.subr.bf16.mxu0 %v2391
    %2986 = vmatpush1.bf16.msra.mxu0 %v2390
    %2987 = vmatprep.subr.bf16.mxu0 %v2399
    %2988 = vmatpush1.bf16.msra.mxu0 %v2398
    %2989 = vmatprep.mubr.bf16.mxu0 %v1077
    %2990 = vmatmul.mubr.bf16.gmra.mrb[0].mxu0 %v1076
    %v2991 = vpop.f32.mrb[0].mxu0
    %v2992 = vadd.f32 %v2949, %v2991
    %v2993 = vpop.f32.mrb[0].mxu0
    %v2994 = vadd.f32 %v2951, %v2993
    %v2995 = vpop.f32.mrb[0].mxu0
    %v2996 = vadd.f32 %v2953, %v2995
    %v2997 = vpop.f32.mrb[0].mxu0
    %v2998 = vadd.f32 %v2955, %v2997
    %2999 = vdwg.mxu0
    %v3000 = vmax.f32 %v2734, 0.0
    %v3001 = vmax.f32 %v2736, 0.0
    %v3002 = vmax.f32 %v2820, 0.0
    %v3003 = vmax.f32 %v2822, 0.0
    %v3004 = vmax.f32 %v2906, 0.0
    %v3005 = vmax.f32 %v2908, 0.0
    %v3006 = vmax.f32 %v2992, 0.0
    %v3007 = vmax.f32 %v2994, 0.0
    %v3008 = vmax.f32 %v2738, 0.0
    %v3009 = vmax.f32 %v2740, 0.0
    %v3010 = vmax.f32 %v2824, 0.0
    %v3011 = vmax.f32 %v2826, 0.0
    %v3012 = vmax.f32 %v2910, 0.0
    %v3013 = vmax.f32 %v2912, 0.0
    %v3014 = vmax.f32 %v2996, 0.0
    %v3015 = vmax.f32 %v2998, 0.0
    %v3016 = vld [vmem:[%s5] sm:$0xff]
    %v3018 = vlaneseq
    %v3019 = vshrl.u32 %v3018, 7
    %v3020 = vsub.s32 0, %v3019
    %v3021 = vrot.slane %v3016, %v3020
    %v3022 = vlaneseq
    %v3023 = vshrl.u32 %v3022, 7
    %v3024 = vsub.s32 1, %v3023
    %v3025 = vrot.slane %v3016, %v3024
    %v3026 = vlaneseq
    %v3027 = vshrl.u32 %v3026, 7
    %v3028 = vsub.s32 2, %v3027
    %v3029 = vrot.slane %v3016, %v3028
    %v3030 = vlaneseq
    %v3031 = vshrl.u32 %v3030, 7
    %v3032 = vsub.s32 3, %v3031
    %v3033 = vrot.slane %v3016, %v3032
    %v3034 = vlaneseq
    %v3035 = vshrl.u32 %v3034, 7
    %v3036 = vsub.s32 4, %v3035
    %v3037 = vrot.slane %v3016, %v3036
    %v3038 = vlaneseq
    %v3039 = vshrl.u32 %v3038, 7
    %v3040 = vsub.s32 5, %v3039
    %v3041 = vrot.slane %v3016, %v3040
    %v3042 = vlaneseq
    %v3043 = vshrl.u32 %v3042, 7
    %v3044 = vsub.s32 6, %v3043
    %v3045 = vrot.slane %v3016, %v3044
    %v3046 = vlaneseq
    %v3047 = vshrl.u32 %v3046, 7
    %v3048 = vsub.s32 7, %v3047
    %v3049 = vrot.slane %v3016, %v3048
    %v3058 = vmul.f32 %v3000, %v3021
    %v3059 = vmul.f32 %v3001, %v3025
    %v3060 = vmul.f32 %v3002, %v3029
    %v3061 = vmul.f32 %v3003, %v3033
    %v3062 = vmul.f32 %v3004, %v3037
    %v3063 = vmul.f32 %v3005, %v3041
    %v3064 = vmul.f32 %v3006, %v3045
    %v3065 = vmul.f32 %v3007, %v3049
    %v3066 = vmul.f32 %v3008, %v3021
    %v3067 = vmul.f32 %v3009, %v3025
    %v3068 = vmul.f32 %v3010, %v3029
    %v3069 = vmul.f32 %v3011, %v3033
    %v3070 = vmul.f32 %v3012, %v3037
    %v3071 = vmul.f32 %v3013, %v3041
    %v3072 = vmul.f32 %v3014, %v3045
    %v3073 = vmul.f32 %v3015, %v3049
    %v3074 = vadd.f32 %v3058, %v3059
    %v3075 = vadd.f32 %v3074, %v3060
    %v3076 = vadd.f32 %v3075, %v3061
    %v3077 = vadd.f32 %v3076, %v3062
    %v3078 = vadd.f32 %v3077, %v3063
    %v3079 = vadd.f32 %v3078, %v3064
    %v3080 = vadd.f32 %v3079, %v3065
    %3081 = vadd.xlane.f32.xlu0 %v3080
    %v3082 = vpop.xlane.xlu0 %3081
    %v3083 = vadd.f32 %v3066, %v3067
    %v3084 = vadd.f32 %v3083, %v3068
    %v3085 = vadd.f32 %v3084, %v3069
    %v3086 = vadd.f32 %v3085, %v3070
    %v3087 = vadd.f32 %v3086, %v3071
    %v3088 = vadd.f32 %v3087, %v3072
    %v3089 = vadd.f32 %v3088, %v3073
    %3090 = vadd.xlane.f32.xlu0 %v3089
    %v3091 = vpop.xlane.xlu0 %3090
    %s3092 = sld [smem:[#allocation2]]
    %v3093 = vstv %s3092
    %v3094 = vadd.f32 %v3082, %v3093
    %v3095 = vadd.f32 %v3091, %v3093
    %vm3096 = vcmask 7168
    %3097 = vst.msk [vmem:[%s7] sm:$0xff] %vm3096, %v3094
    %3098 = vst.msk [vmem:[%s7 + $0x8] sm:$0xff] %vm3096, %v3095
    // Predicated region
    $region46: #{tpu_custom_call.1} parent=1 // pred_check
      _
    $region47: #{tpu_custom_call.1} parent=1 // pred_check_branch
      %3100 = sbr.rel (0) target = $region49
    $region48: #{tpu_custom_call.1} parent=1 // pred_region
      _
    $region49: #{tpu_custom_call.1} parent=1 // pred_fallthru
      _
    // Predicated region
    $region50: #{tpu_custom_call.1} parent=1 // pred_check
      _
    $region51: #{tpu_custom_call.1} parent=1 // pred_check_branch
      %3102 = sbr.rel (0) target = $region53
    $region52: #{tpu_custom_call.1} parent=1 // pred_region
      _
    $region53: #{tpu_custom_call.1} parent=1 // pred_fallthru
      _
    %3103 = vsyncpa [#allocation4], 1
    %3104 = vsyncpa [#allocation6], 1
    %3105 = vsyncpa [#allocation9], 1

</llo_original>
